<compile_context>
chip_gen: v6e
topology: v6e:2x2x1
jax: 0.10.0
libtpu: 0.0.40
codegen_flags: <defaults>
</compile_context>

<pallas_src>
import functools

import jax
import jax.numpy as jnp
import numpy as np
from jax.experimental import pallas as pl
from jax.experimental.pallas import tpu as pltpu


def _round_up(x, m):
    return ((x + m - 1) // m) * m


# ------------------------------ Pallas kernel --------------------------------
def _conv25d_kernel(bf_ref, fx_ref, x_ref, d_ref, w_ref, b_ref, o_ref, xm_ref, *,
                    C, K, kw, Wp, TH, CKpad, pixel_size, dil_h, dil_w):
    """One (batch, row-tile) step of the dense (stride-1) 2.5D conv.

    x_ref : (C, TLIN)      compute dtype, halo'd rows, row-major flattened
    d_ref : (1, TLIN)      f32 disparity, same layout
    w_ref : (O, 3*CKpad)   compute dtype, [W0|W1|W2], col = p*CKpad + k*C + c
    b_ref : (O, 1)         f32 bias
    o_ref : (O, TL)        f32 output tile (TL = TH*Wp; right-edge cols junk)
    xm_ref: (3*CKpad, TL)  VMEM scratch holding the masked taps
    """
    n = pl.program_id(0)
    bf = bf_ref[n]                      # baseline * fx   (SMEM scalar)
    fx = fx_ref[n]                      # fx              (SMEM scalar)
    TL = TH * Wp
    CK = C * K
    cdt = x_ref.dtype
    k2 = K // 2
    c_off = (k2 // kw) * dil_h * Wp + (k2 % kw) * dil_w

    # Zero the alignment-padding rows of the scratch once per step so the
    # fused dot never touches uninitialized VMEM (their weight columns are
    # zero, but NaN * 0 = NaN).
    if CKpad > CK:
        pad = CKpad - CK
        zpad = jnp.zeros((pad, TL), cdt)
        for p in range(3):
            xm_ref[pl.ds(p * CKpad + CK, pad), :] = zpad

    # ---- center-pixel quantities, (1, TL), f32 ----
    d_c = d_ref[:, pl.ds(c_off, TL)]
    valid_c = d_c != 0.0
    cdep = bf / jnp.clip(jnp.where(valid_c, d_c, 0.0), 0.01, 256.0)
    gr = (pixel_size * dil_h) * cdep / fx
    half = gr * 0.5
    hi = cdep + gr
    lo = cdep - gr

    # ---- per tap: lane-slice x/disp out of the halo'd tile, mask, store ----
    for k in range(K):
        i, j = divmod(k, kw)
        off = i * dil_h * Wp + j * dil_w
        d_k = d_ref[:, pl.ds(off, TL)]                        # (1, TL) f32
        valid_k = jnp.logical_and(d_k != 0.0, valid_c)
        depth_k = bf / jnp.clip(jnp.where(valid_k, d_k, 0.0), 0.01, 256.0)
        m0 = jnp.abs(depth_k - hi) <= half
        m1 = jnp.logical_or(jnp.abs(depth_k - cdep) <= half,
                            jnp.logical_not(valid_k))
        m2 = jnp.abs(depth_k - lo) <= half

        x_k = x_ref[:, pl.ds(off, TL)]                        # (C, TL)
        zero = jnp.zeros_like(x_k)
        for p, m in enumerate((m0, m1, m2)):
            # masks depend only on the tap -> broadcast over C via select
            xm_ref[pl.ds(p * CKpad + k * C, C), :] = jnp.where(m, x_k, zero)

    # ---- single fused MXU matmul + exact-f32 bias epilogue ----
    acc = jnp.dot(w_ref[...], xm_ref[...], preferred_element_type=jnp.float32)
    o_ref[...] = (acc + b_ref[...]).astype(o_ref.dtype)


# -------------------------------- wrapper ------------------------------------
def conv_2_5d_disp(x, disp, baseline, fx, w0, w1, w2, bias=None, *,
                   kernel_size=(3, 3), stride=(1, 1), padding=(1, 1),
                   dilation=(1, 1), pixel_size=16, tile_l=1024,
                   compute_dtype=jnp.bfloat16):
    N, C, H, W = x.shape
    kh, kw = kernel_size
    sh, sw = stride
    ph, pw = padding
    dh, dw = dilation
    K = kh * kw
    O = w0.shape[0]

    # Dense (stride-1) output map; the strided output is a subsample of it.
    out_h1 = H + 2 * ph - dh * (kh - 1)
    out_w1 = W + 2 * pw - dw * (kw - 1)
    out_h = (out_h1 - 1) // sh + 1
    out_w = (out_w1 - 1) // sw + 1
    Wp = W + 2 * pw
    assert out_h1 >= 1 and out_w1 >= 1

    cb = jnp.dtype(compute_dtype).itemsize
    pack = 16 if cb == 2 else 8
    CK = C * K
    CKpad = _round_up(CK, pack)

    # ---- choose TH (dense output rows per grid step) ----
    TH = max(1, min(out_h1, max(1, int(tile_l)) // max(1, Wp)))
    w_bytes = 2 * O * 3 * CKpad * cb                  # double-buffered fused W

    def _vmem_est(th):
        tl = th * Wp
        tlin = (th + dh * (kh - 1) + 1) * Wp
        return (2 * C * tlin * cb        # x tile (double buffered)
                + 2 * tlin * 4           # disp tile
                + 2 * O * tl * 4         # output tile
                + 3 * CKpad * tl * cb    # xm scratch
                + w_bytes + 2 * O * 4)

    # keep streaming terms bounded so the kernel also fits v7x's 64 MiB VMEM
    while TH > 1 and _vmem_est(TH) > 24 * 2**20 + w_bytes:
        TH = (TH + 1) // 2
    # keep >= 4 grid steps when possible (v7x has 2 TensorCores)
    while TH > 1 and N * ((out_h1 + TH - 1) // TH) < 4:
        TH = (TH + 1) // 2

    n_tiles = (out_h1 + TH - 1) // TH
    TL = TH * Wp
    TH_in = TH + dh * (kh - 1) + 1       # +1 row: last row's right-hand taps
    TLIN = TH_in * Wp

    # ---- zero-padded image, flattened row-major; halo'd row tiles ----
    Hp = (n_tiles - 1) * TH + TH_in
    xpad = jnp.pad(x, ((0, 0), (0, 0), (ph, Hp - H - ph), (pw, pw)))
    dpad = jnp.pad(disp, ((0, 0), (0, 0), (ph, Hp - H - ph), (pw, pw)))
    xflat = xpad.reshape(N, C, Hp * Wp).astype(compute_dtype)
    dflat = dpad.reshape(N, 1, Hp * Wp).astype(jnp.float32)
    x_tiles = jnp.stack(
        [xflat[:, :, t * TL: t * TL + TLIN] for t in range(n_tiles)], axis=1)
    d_tiles = jnp.stack(
        [dflat[:, :, t * TL: t * TL + TLIN] for t in range(n_tiles)], axis=1)

    # ---- fused weight [W0|W1|W2]: column = p*CKpad + k*C + c ----
    def _plane(w):
        wt = jnp.transpose(w.reshape(O, C, K), (0, 2, 1)).reshape(O, CK)
        return jnp.pad(wt, ((0, 0), (0, CKpad - CK)))

    w_full = jnp.concatenate([_plane(w0), _plane(w1), _plane(w2)],
                             axis=1).astype(compute_dtype)
    b_col = (jnp.zeros((O,), jnp.float32) if bias is None
             else bias.astype(jnp.float32)).reshape(O, 1)

    bf = (baseline * fx).astype(jnp.float32)
    fxf = fx.astype(jnp.float32)

    kernel = functools.partial(
        _conv25d_kernel, C=C, K=K, kw=kw, Wp=Wp, TH=TH, CKpad=CKpad,
        pixel_size=float(pixel_size), dil_h=dh, dil_w=dw)

    vmem_limit = int(min(112 * 2**20,
                         max(32 * 2**20, int(1.5 * _vmem_est(TH)) + (1 << 20))))

    out_tiles = pl.pallas_call(
        kernel,
        out_shape=jax.ShapeDtypeStruct((N, n_tiles, O, TL), jnp.float32),
        grid=(N, n_tiles),
        in_specs=[
            pl.BlockSpec(memory_space=pltpu.SMEM),                    # baseline*fx
            pl.BlockSpec(memory_space=pltpu.SMEM),                    # fx
            pl.BlockSpec((None, None, C, TLIN), lambda n, t: (n, t, 0, 0)),
            pl.BlockSpec((None, None, 1, TLIN), lambda n, t: (n, t, 0, 0)),
            pl.BlockSpec((O, 3 * CKpad), lambda n, t: (0, 0)),        # fused W
            pl.BlockSpec((O, 1), lambda n, t: (0, 0)),                # f32 bias
        ],
        out_specs=pl.BlockSpec((None, None, O, TL), lambda n, t: (n, t, 0, 0)),
        scratch_shapes=[pltpu.VMEM((3 * CKpad, TL), compute_dtype)],
        compiler_params=pltpu.CompilerParams(
            dimension_semantics=("parallel", "parallel"),
            vmem_limit_bytes=vmem_limit),
    )(bf, fxf, x_tiles, d_tiles, w_full, b_col)

    dense = out_tiles.reshape(N, n_tiles, O, TH, Wp)
    dense = jnp.transpose(dense, (0, 2, 1, 3, 4)).reshape(N, O, n_tiles * TH, Wp)
    out = dense[:, :, 0:out_h1:sh, 0:out_w1:sw]     # drop pad rows / junk cols,
    return out                                      # apply stride by subsample


# --------------------------- pure-JAX reference -------------------------------
def _unfold(x, kernel_size, stride, padding, dilation):
    """F.unfold equivalent, returns (N, C, kh*kw, out_H*out_W)."""
    N, C, H, W = x.shape
    kh, kw = kernel_size
    sh, sw = stride
    ph, pw = padding
    dh, dw = dilation
    out_h = (H + 2 * ph - dh * (kh - 1) - 1) // sh + 1
    out_w = (W + 2 * pw - dw * (kw - 1) - 1) // sw + 1
    xp = jnp.pad(x, ((0, 0), (0, 0), (ph, ph), (pw, pw)))
    cols = []
    for i in range(kh):
        for j in range(kw):
            patch = xp[:, :,
                       i * dh: i * dh + sh * (out_h - 1) + 1: sh,
                       j * dw: j * dw + sw * (out_w - 1) + 1: sw]
            cols.append(patch.reshape(N, C, out_h * out_w))
    return jnp.stack(cols, axis=2)  # (N, C, K, L)


def conv_2_5d_disp_ref(x, disp, baseline, fx, w0, w1, w2, bias, *,
                       kernel_size=(3, 3), stride=(1, 1), padding=(1, 1),
                       dilation=(1, 1), pixel_size=16):
    N, C, H, W = x.shape
    kh, kw = kernel_size
    K = kh * kw
    O = w0.shape[0]
    out_h = (H + 2 * padding[0] - dilation[0] * (kh - 1) - 1) // stride[0] + 1
    out_w = (W + 2 * padding[1] - dilation[1] * (kw - 1) - 1) // stride[1] + 1
    L = out_h * out_w
    x_col = _unfold(x, kernel_size, stride, padding, dilation)            # (N,C,K,L)
    disp_col = _unfold(disp, kernel_size, stride, padding, dilation).reshape(N, K, L)
    valid = 1.0 - (disp_col == 0.0).astype(jnp.float32)
    valid = valid * valid[:, K // 2, :][:, None, :]
    disp_col = disp_col * valid
    depth = (baseline * fx).reshape(N, 1, 1) / jnp.clip(disp_col, 0.01, 256.0)
    valid4 = valid.reshape(N, 1, K, L)
    cdep = depth[:, K // 2, :].reshape(N, 1, L)
    gr = pixel_size * dilation[0] * cdep / fx.reshape(N, 1, 1)
    m0 = (jnp.abs(depth - (cdep + gr)) <= gr / 2).reshape(N, 1, K, L).astype(jnp.float32)
    m1 = (jnp.abs(depth - cdep) <= gr / 2).reshape(N, 1, K, L).astype(jnp.float32)
    m1 = jnp.clip(m1 + 1.0 - valid4, 0.0, 1.0)
    m2 = (jnp.abs(depth - (cdep - gr)) <= gr / 2).reshape(N, 1, K, L).astype(jnp.float32)
    w0r, w1r, w2r = (w.reshape(O, C * K) for w in (w0, w1, w2))
    out = jnp.einsum('of,nfl->nol', w0r, (x_col * m0).reshape(N, C * K, L))
    out += jnp.einsum('of,nfl->nol', w1r, (x_col * m1).reshape(N, C * K, L))
    out += jnp.einsum('of,nfl->nol', w2r, (x_col * m2).reshape(N, C * K, L))
    # NOTE: original `if self.bias:` is buggy for tensors; we add bias when present.
    return out.reshape(N, O, out_h, out_w) + bias.reshape(1, O, 1, 1)


# ---------------------------------- main --------------------------------------
if __name__ == "__main__":
    N, C, O, H, W = 2, 4, 8, 16, 16
    pixel_size = 16

    key = jax.random.PRNGKey(0)
    kx, kd, k0, k1, k2, kb = jax.random.split(key, 6)

    x = jax.random.normal(kx, (N, C, H, W), jnp.float32)
    disp_raw = jax.random.uniform(kd, (N, 1, H, W), jnp.float32, 0.0, 64.0)
    disp = jnp.where(disp_raw < 8.0, 0.0, disp_raw)          # some invalid pixels
    fx = jnp.array([700.0, 720.0], jnp.float32)              # intrinsic['fx']
    baseline = jnp.array([0.50, 0.54], jnp.float32)          # extrinsic['baseline']

    w0 = 0.1 * jax.random.normal(k0, (O, C, 3, 3), jnp.float32)
    w1 = 0.1 * jax.random.normal(k1, (O, C, 3, 3), jnp.float32)
    w2 = 0.1 * jax.random.normal(k2, (O, C, 3, 3), jnp.float32)
    bias = 0.1 * jax.random.normal(kb, (O,), jnp.float32)

    configs = [
        dict(kernel_size=(3, 3), stride=(1, 1), padding=(1, 1), dilation=(1, 1)),
        dict(kernel_size=(3, 3), stride=(2, 2), padding=(1, 1), dilation=(1, 1)),
        dict(kernel_size=(3, 3), stride=(1, 1), padding=(2, 2), dilation=(2, 2)),
    ]

    for cfg in configs:
        ref = conv_2_5d_disp_ref(x, disp, baseline, fx, w0, w1, w2, bias,
                                 pixel_size=pixel_size, **cfg)
        # f32 compute path (tight structural check); small tile_l so the
        # multi-row-tile grid path (n_tiles > 1) is exercised.
        out_f32 = conv_2_5d_disp(x, disp, baseline, fx, w0, w1, w2, bias,
                                 pixel_size=pixel_size, tile_l=128,
                                 compute_dtype=jnp.float32, **cfg)
        out_f32 = jax.block_until_ready(out_f32)
        np.testing.assert_allclose(np.asarray(out_f32), np.asarray(ref),
                                   rtol=1e-3, atol=1e-3)

    # bf16 compute path (default / perf configuration), looser tolerance.
    ref = conv_2_5d_disp_ref(x, disp, baseline, fx, w0, w1, w2, bias,
                             pixel_size=pixel_size, **configs[0])
    out_bf16 = conv_2_5d_disp(x, disp, baseline, fx, w0, w1, w2, bias,
                              pixel_size=pixel_size,
                              compute_dtype=jnp.bfloat16, **configs[0])
    out_bf16 = jax.block_until_ready(out_bf16)
    np.testing.assert_allclose(np.asarray(out_bf16), np.asarray(ref),
                               rtol=2e-2, atol=2e-2)

    print("KERNEL_OK")
</pallas_src>

<mosaic_0001>
module attributes {stable_mosaic.version = 11 : i64} {
  func.func @_conv25d_kernel(%arg0: i32, %arg1: i32, %arg2: memref<2xf32, #tpu.memory_space<smem>>, %arg3: memref<2xf32, #tpu.memory_space<smem>>, %arg4: memref<1x1x4x180xf32, #tpu.memory_space<vmem>>, %arg5: memref<1x1x1x180xf32, #tpu.memory_space<vmem>>, %arg6: memref<8x120xf32, #tpu.memory_space<vmem>>, %arg7: memref<8x1xf32, #tpu.memory_space<vmem>>, %arg8: memref<1x1x8x126xf32, #tpu.memory_space<vmem>>, %arg9: memref<120x126xf32, #tpu.memory_space<vmem>>) attributes {dimension_semantics = [#tpu.dimension_semantics<parallel>, #tpu.dimension_semantics<parallel>], iteration_bounds = array<i64: 2, 3>, scalar_prefetch = 0 : i64, scratch_operands = 1 : i64, tpu.core_type = #tpu.core_type<tc>, window_params = [{transform_indices = @transform_0, window_bounds = array<i64: 2>}, {transform_indices = @transform_1, window_bounds = array<i64: 2>}, {transform_indices = @transform_2, window_bounds = array<i64: 1, 1, 4, 180>}, {transform_indices = @transform_3, window_bounds = array<i64: 1, 1, 1, 180>}, {pipeline_mode = #tpu.pipeline_mode<synchronous>, transform_indices = @transform_4, window_bounds = array<i64: 8, 120>}, {pipeline_mode = #tpu.pipeline_mode<synchronous>, transform_indices = @transform_5, window_bounds = array<i64: 8, 1>}, {transform_indices = @transform_6, window_bounds = array<i64: 1, 1, 8, 126>}]} {
    %0 = arith.index_cast %arg0 : i32 to index
    %1 = memref.load %arg2[%0] : memref<2xf32, #tpu.memory_space<smem>>
    %2 = arith.index_cast %arg0 : i32 to index
    %3 = memref.load %arg3[%2] : memref<2xf32, #tpu.memory_space<smem>>
    %cst = arith.constant 0.000000e+00 : f32
    %4 = vector.broadcast %cst : f32 to vector<4x126xf32>
    %c36 = arith.constant 36 : index
    %c0 = arith.constant 0 : index
    %5 = vector.load %arg9[%c36, %c0] : memref<120x126xf32, #tpu.memory_space<vmem>>, vector<4x126xf32>
    tpu.vector_store %arg9[%c36, %c0], %4 {strides = array<i32>} : memref<120x126xf32, #tpu.memory_space<vmem>>, vector<4x126xf32>,
    %c76 = arith.constant 76 : index
    %c0_0 = arith.constant 0 : index
    %6 = vector.load %arg9[%c76, %c0_0] : memref<120x126xf32, #tpu.memory_space<vmem>>, vector<4x126xf32>
    tpu.vector_store %arg9[%c76, %c0_0], %4 {strides = array<i32>} : memref<120x126xf32, #tpu.memory_space<vmem>>, vector<4x126xf32>,
    %c116 = arith.constant 116 : index
    %c0_1 = arith.constant 0 : index
    %7 = vector.load %arg9[%c116, %c0_1] : memref<120x126xf32, #tpu.memory_space<vmem>>, vector<4x126xf32>
    tpu.vector_store %arg9[%c116, %c0_1], %4 {strides = array<i32>} : memref<120x126xf32, #tpu.memory_space<vmem>>, vector<4x126xf32>,
    %c0_2 = arith.constant 0 : index
    %c0_3 = arith.constant 0 : index
    %c0_4 = arith.constant 0 : index
    %c19 = arith.constant 19 : index
    %8 = vector.load %arg5[%c0_2, %c0_3, %c0_4, %c19] : memref<1x1x1x180xf32, #tpu.memory_space<vmem>>, vector<1x1x1x126xf32>
    %9 = vector.shape_cast %8 : vector<1x1x1x126xf32> to vector<1x126xf32>
    %cst_5 = arith.constant 0.000000e+00 : f32
    %10 = vector.broadcast %cst_5 : f32 to vector<1x126xf32>
    %11 = arith.cmpf one, %9, %10 : vector<1x126xf32>
    %cst_6 = arith.constant 0.000000e+00 : f32
    %12 = vector.broadcast %cst_6 : f32 to vector<1x126xf32>
    %13 = arith.select %11, %9, %12 : vector<1x126xi1>, vector<1x126xf32>
    %cst_7 = arith.constant 0.00999999977 : f32
    %cst_8 = arith.constant 2.560000e+02 : f32
    %14 = vector.broadcast %cst_7 : f32 to vector<1x126xf32>
    %15 = arith.maximumf %14, %13 : vector<1x126xf32>
    %16 = vector.broadcast %cst_8 : f32 to vector<1x126xf32>
    %17 = arith.minimumf %16, %15 : vector<1x126xf32>
    %18 = vector.broadcast %1 : f32 to vector<1x126xf32>
    %19 = arith.divf %18, %17 : vector<1x126xf32>
    %cst_9 = arith.constant 1.600000e+01 : f32
    %20 = vector.broadcast %cst_9 : f32 to vector<1x126xf32>
    %21 = arith.mulf %20, %19 : vector<1x126xf32>
    %22 = vector.broadcast %3 : f32 to vector<1x126xf32>
    %23 = arith.divf %21, %22 : vector<1x126xf32>
    %cst_10 = arith.constant 5.000000e-01 : f32
    %24 = vector.broadcast %cst_10 : f32 to vector<1x126xf32>
    %25 = arith.mulf %23, %24 : vector<1x126xf32>
    %26 = arith.addf %19, %23 : vector<1x126xf32>
    %27 = arith.subf %19, %23 : vector<1x126xf32>
    %c0_11 = arith.constant 0 : index
    %c0_12 = arith.constant 0 : index
    %c0_13 = arith.constant 0 : index
    %c0_14 = arith.constant 0 : index
    %28 = vector.load %arg5[%c0_11, %c0_12, %c0_13, %c0_14] : memref<1x1x1x180xf32, #tpu.memory_space<vmem>>, vector<1x1x1x126xf32>
    %29 = vector.shape_cast %28 : vector<1x1x1x126xf32> to vector<1x126xf32>
    %cst_15 = arith.constant 0.000000e+00 : f32
    %30 = vector.broadcast %cst_15 : f32 to vector<1x126xf32>
    %31 = arith.cmpf one, %29, %30 : vector<1x126xf32>
    %32 = arith.andi %31, %11 : vector<1x126xi1>
    %cst_16 = arith.constant 0.000000e+00 : f32
    %33 = vector.broadcast %cst_16 : f32 to vector<1x126xf32>
    %34 = arith.select %32, %29, %33 : vector<1x126xi1>, vector<1x126xf32>
    %cst_17 = arith.constant 0.00999999977 : f32
    %cst_18 = arith.constant 2.560000e+02 : f32
    %35 = vector.broadcast %cst_17 : f32 to vector<1x126xf32>
    %36 = arith.maximumf %35, %34 : vector<1x126xf32>
    %37 = vector.broadcast %cst_18 : f32 to vector<1x126xf32>
    %38 = arith.minimumf %37, %36 : vector<1x126xf32>
    %39 = vector.broadcast %1 : f32 to vector<1x126xf32>
    %40 = arith.divf %39, %38 : vector<1x126xf32>
    %41 = arith.subf %40, %26 : vector<1x126xf32>
    %42 = math.absf %41 : vector<1x126xf32>
    %43 = arith.cmpf ole, %42, %25 : vector<1x126xf32>
    %44 = arith.subf %40, %19 : vector<1x126xf32>
    %45 = math.absf %44 : vector<1x126xf32>
    %46 = arith.cmpf ole, %45, %25 : vector<1x126xf32>
    %cst_19 = arith.constant dense<true> : vector<1x126xi1>
    %47 = arith.xori %32, %cst_19 : vector<1x126xi1>
    %48 = arith.ori %46, %47 : vector<1x126xi1>
    %49 = arith.subf %40, %27 : vector<1x126xf32>
    %50 = math.absf %49 : vector<1x126xf32>
    %51 = arith.cmpf ole, %50, %25 : vector<1x126xf32>
    %c0_20 = arith.constant 0 : index
    %c0_21 = arith.constant 0 : index
    %c0_22 = arith.constant 0 : index
    %c0_23 = arith.constant 0 : index
    %52 = vector.load %arg4[%c0_20, %c0_21, %c0_22, %c0_23] : memref<1x1x4x180xf32, #tpu.memory_space<vmem>>, vector<1x1x4x126xf32>
    %53 = vector.shape_cast %52 : vector<1x1x4x126xf32> to vector<4x126xf32>
    %cst_24 = arith.constant 0.000000e+00 : f32
    %54 = vector.broadcast %cst_24 : f32 to vector<4x126xf32>
    %55 = vector.shape_cast %43 : vector<1x126xi1> to vector<1x126xi1>
    %56 = vector.broadcast %55 : vector<1x126xi1> to vector<4x126xi1>
    %57 = arith.select %56, %53, %54 : vector<4x126xi1>, vector<4x126xf32>
    %c0_25 = arith.constant 0 : index
    %c0_26 = arith.constant 0 : index
    %58 = vector.load %arg9[%c0_25, %c0_26] : memref<120x126xf32, #tpu.memory_space<vmem>>, vector<4x126xf32>
    tpu.vector_store %arg9[%c0_25, %c0_26], %57 {strides = array<i32>} : memref<120x126xf32, #tpu.memory_space<vmem>>, vector<4x126xf32>,
    %59 = vector.shape_cast %48 : vector<1x126xi1> to vector<1x126xi1>
    %60 = vector.broadcast %59 : vector<1x126xi1> to vector<4x126xi1>
    %61 = arith.select %60, %53, %54 : vector<4x126xi1>, vector<4x126xf32>
    %c40 = arith.constant 40 : index
    %c0_27 = arith.constant 0 : index
    %62 = vector.load %arg9[%c40, %c0_27] : memref<120x126xf32, #tpu.memory_space<vmem>>, vector<4x126xf32>
    tpu.vector_store %arg9[%c40, %c0_27], %61 {strides = array<i32>} : memref<120x126xf32, #tpu.memory_space<vmem>>, vector<4x126xf32>,
    %63 = vector.shape_cast %51 : vector<1x126xi1> to vector<1x126xi1>
    %64 = vector.broadcast %63 : vector<1x126xi1> to vector<4x126xi1>
    %65 = arith.select %64, %53, %54 : vector<4x126xi1>, vector<4x126xf32>
    %c80 = arith.constant 80 : index
    %c0_28 = arith.constant 0 : index
    %66 = vector.load %arg9[%c80, %c0_28] : memref<120x126xf32, #tpu.memory_space<vmem>>, vector<4x126xf32>
    tpu.vector_store %arg9[%c80, %c0_28], %65 {strides = array<i32>} : memref<120x126xf32, #tpu.memory_space<vmem>>, vector<4x126xf32>,
    %c0_29 = arith.constant 0 : index
    %c0_30 = arith.constant 0 : index
    %c0_31 = arith.constant 0 : index
    %c1 = arith.constant 1 : index
    %67 = vector.load %arg5[%c0_29, %c0_30, %c0_31, %c1] : memref<1x1x1x180xf32, #tpu.memory_space<vmem>>, vector<1x1x1x126xf32>
    %68 = vector.shape_cast %67 : vector<1x1x1x126xf32> to vector<1x126xf32>
    %cst_32 = arith.constant 0.000000e+00 : f32
    %69 = vector.broadcast %cst_32 : f32 to vector<1x126xf32>
    %70 = arith.cmpf one, %68, %69 : vector<1x126xf32>
    %71 = arith.andi %70, %11 : vector<1x126xi1>
    %cst_33 = arith.constant 0.000000e+00 : f32
    %72 = vector.broadcast %cst_33 : f32 to vector<1x126xf32>
    %73 = arith.select %71, %68, %72 : vector<1x126xi1>, vector<1x126xf32>
    %cst_34 = arith.constant 0.00999999977 : f32
    %cst_35 = arith.constant 2.560000e+02 : f32
    %74 = vector.broadcast %cst_34 : f32 to vector<1x126xf32>
    %75 = arith.maximumf %74, %73 : vector<1x126xf32>
    %76 = vector.broadcast %cst_35 : f32 to vector<1x126xf32>
    %77 = arith.minimumf %76, %75 : vector<1x126xf32>
    %78 = vector.broadcast %1 : f32 to vector<1x126xf32>
    %79 = arith.divf %78, %77 : vector<1x126xf32>
    %80 = arith.subf %79, %26 : vector<1x126xf32>
    %81 = math.absf %80 : vector<1x126xf32>
    %82 = arith.cmpf ole, %81, %25 : vector<1x126xf32>
    %83 = arith.subf %79, %19 : vector<1x126xf32>
    %84 = math.absf %83 : vector<1x126xf32>
    %85 = arith.cmpf ole, %84, %25 : vector<1x126xf32>
    %cst_36 = arith.constant dense<true> : vector<1x126xi1>
    %86 = arith.xori %71, %cst_36 : vector<1x126xi1>
    %87 = arith.ori %85, %86 : vector<1x126xi1>
    %88 = arith.subf %79, %27 : vector<1x126xf32>
    %89 = math.absf %88 : vector<1x126xf32>
    %90 = arith.cmpf ole, %89, %25 : vector<1x126xf32>
    %c0_37 = arith.constant 0 : index
    %c0_38 = arith.constant 0 : index
    %c0_39 = arith.constant 0 : index
    %c1_40 = arith.constant 1 : index
    %91 = vector.load %arg4[%c0_37, %c0_38, %c0_39, %c1_40] : memref<1x1x4x180xf32, #tpu.memory_space<vmem>>, vector<1x1x4x126xf32>
    %92 = vector.shape_cast %91 : vector<1x1x4x126xf32> to vector<4x126xf32>
    %cst_41 = arith.constant 0.000000e+00 : f32
    %93 = vector.broadcast %cst_41 : f32 to vector<4x126xf32>
    %94 = vector.shape_cast %82 : vector<1x126xi1> to vector<1x126xi1>
    %95 = vector.broadcast %94 : vector<1x126xi1> to vector<4x126xi1>
    %96 = arith.select %95, %92, %93 : vector<4x126xi1>, vector<4x126xf32>
    %c4 = arith.constant 4 : index
    %c0_42 = arith.constant 0 : index
    %97 = vector.load %arg9[%c4, %c0_42] : memref<120x126xf32, #tpu.memory_space<vmem>>, vector<4x126xf32>
    tpu.vector_store %arg9[%c4, %c0_42], %96 {strides = array<i32>} : memref<120x126xf32, #tpu.memory_space<vmem>>, vector<4x126xf32>,
    %98 = vector.shape_cast %87 : vector<1x126xi1> to vector<1x126xi1>
    %99 = vector.broadcast %98 : vector<1x126xi1> to vector<4x126xi1>
    %100 = arith.select %99, %92, %93 : vector<4x126xi1>, vector<4x126xf32>
    %c44 = arith.constant 44 : index
    %c0_43 = arith.constant 0 : index
    %101 = vector.load %arg9[%c44, %c0_43] : memref<120x126xf32, #tpu.memory_space<vmem>>, vector<4x126xf32>
    tpu.vector_store %arg9[%c44, %c0_43], %100 {strides = array<i32>} : memref<120x126xf32, #tpu.memory_space<vmem>>, vector<4x126xf32>,
    %102 = vector.shape_cast %90 : vector<1x126xi1> to vector<1x126xi1>
    %103 = vector.broadcast %102 : vector<1x126xi1> to vector<4x126xi1>
    %104 = arith.select %103, %92, %93 : vector<4x126xi1>, vector<4x126xf32>
    %c84 = arith.constant 84 : index
    %c0_44 = arith.constant 0 : index
    %105 = vector.load %arg9[%c84, %c0_44] : memref<120x126xf32, #tpu.memory_space<vmem>>, vector<4x126xf32>
    tpu.vector_store %arg9[%c84, %c0_44], %104 {strides = array<i32>} : memref<120x126xf32, #tpu.memory_space<vmem>>, vector<4x126xf32>,
    %c0_45 = arith.constant 0 : index
    %c0_46 = arith.constant 0 : index
    %c0_47 = arith.constant 0 : index
    %c2 = arith.constant 2 : index
    %106 = vector.load %arg5[%c0_45, %c0_46, %c0_47, %c2] : memref<1x1x1x180xf32, #tpu.memory_space<vmem>>, vector<1x1x1x126xf32>
    %107 = vector.shape_cast %106 : vector<1x1x1x126xf32> to vector<1x126xf32>
    %cst_48 = arith.constant 0.000000e+00 : f32
    %108 = vector.broadcast %cst_48 : f32 to vector<1x126xf32>
    %109 = arith.cmpf one, %107, %108 : vector<1x126xf32>
    %110 = arith.andi %109, %11 : vector<1x126xi1>
    %cst_49 = arith.constant 0.000000e+00 : f32
    %111 = vector.broadcast %cst_49 : f32 to vector<1x126xf32>
    %112 = arith.select %110, %107, %111 : vector<1x126xi1>, vector<1x126xf32>
    %cst_50 = arith.constant 0.00999999977 : f32
    %cst_51 = arith.constant 2.560000e+02 : f32
    %113 = vector.broadcast %cst_50 : f32 to vector<1x126xf32>
    %114 = arith.maximumf %113, %112 : vector<1x126xf32>
    %115 = vector.broadcast %cst_51 : f32 to vector<1x126xf32>
    %116 = arith.minimumf %115, %114 : vector<1x126xf32>
    %117 = vector.broadcast %1 : f32 to vector<1x126xf32>
    %118 = arith.divf %117, %116 : vector<1x126xf32>
    %119 = arith.subf %118, %26 : vector<1x126xf32>
    %120 = math.absf %119 : vector<1x126xf32>
    %121 = arith.cmpf ole, %120, %25 : vector<1x126xf32>
    %122 = arith.subf %118, %19 : vector<1x126xf32>
    %123 = math.absf %122 : vector<1x126xf32>
    %124 = arith.cmpf ole, %123, %25 : vector<1x126xf32>
    %cst_52 = arith.constant dense<true> : vector<1x126xi1>
    %125 = arith.xori %110, %cst_52 : vector<1x126xi1>
    %126 = arith.ori %124, %125 : vector<1x126xi1>
    %127 = arith.subf %118, %27 : vector<1x126xf32>
    %128 = math.absf %127 : vector<1x126xf32>
    %129 = arith.cmpf ole, %128, %25 : vector<1x126xf32>
    %c0_53 = arith.constant 0 : index
    %c0_54 = arith.constant 0 : index
    %c0_55 = arith.constant 0 : index
    %c2_56 = arith.constant 2 : index
    %130 = vector.load %arg4[%c0_53, %c0_54, %c0_55, %c2_56] : memref<1x1x4x180xf32, #tpu.memory_space<vmem>>, vector<1x1x4x126xf32>
    %131 = vector.shape_cast %130 : vector<1x1x4x126xf32> to vector<4x126xf32>
    %cst_57 = arith.constant 0.000000e+00 : f32
    %132 = vector.broadcast %cst_57 : f32 to vector<4x126xf32>
    %133 = vector.shape_cast %121 : vector<1x126xi1> to vector<1x126xi1>
    %134 = vector.broadcast %133 : vector<1x126xi1> to vector<4x126xi1>
    %135 = arith.select %134, %131, %132 : vector<4x126xi1>, vector<4x126xf32>
    %c8 = arith.constant 8 : index
    %c0_58 = arith.constant 0 : index
    %136 = vector.load %arg9[%c8, %c0_58] : memref<120x126xf32, #tpu.memory_space<vmem>>, vector<4x126xf32>
    tpu.vector_store %arg9[%c8, %c0_58], %135 {strides = array<i32>} : memref<120x126xf32, #tpu.memory_space<vmem>>, vector<4x126xf32>,
    %137 = vector.shape_cast %126 : vector<1x126xi1> to vector<1x126xi1>
    %138 = vector.broadcast %137 : vector<1x126xi1> to vector<4x126xi1>
    %139 = arith.select %138, %131, %132 : vector<4x126xi1>, vector<4x126xf32>
    %c48 = arith.constant 48 : index
    %c0_59 = arith.constant 0 : index
    %140 = vector.load %arg9[%c48, %c0_59] : memref<120x126xf32, #tpu.memory_space<vmem>>, vector<4x126xf32>
    tpu.vector_store %arg9[%c48, %c0_59], %139 {strides = array<i32>} : memref<120x126xf32, #tpu.memory_space<vmem>>, vector<4x126xf32>,
    %141 = vector.shape_cast %129 : vector<1x126xi1> to vector<1x126xi1>
    %142 = vector.broadcast %141 : vector<1x126xi1> to vector<4x126xi1>
    %143 = arith.select %142, %131, %132 : vector<4x126xi1>, vector<4x126xf32>
    %c88 = arith.constant 88 : index
    %c0_60 = arith.constant 0 : index
    %144 = vector.load %arg9[%c88, %c0_60] : memref<120x126xf32, #tpu.memory_space<vmem>>, vector<4x126xf32>
    tpu.vector_store %arg9[%c88, %c0_60], %143 {strides = array<i32>} : memref<120x126xf32, #tpu.memory_space<vmem>>, vector<4x126xf32>,
    %c0_61 = arith.constant 0 : index
    %c0_62 = arith.constant 0 : index
    %c0_63 = arith.constant 0 : index
    %c18 = arith.constant 18 : index
    %145 = vector.load %arg5[%c0_61, %c0_62, %c0_63, %c18] : memref<1x1x1x180xf32, #tpu.memory_space<vmem>>, vector<1x1x1x126xf32>
    %146 = vector.shape_cast %145 : vector<1x1x1x126xf32> to vector<1x126xf32>
    %cst_64 = arith.constant 0.000000e+00 : f32
    %147 = vector.broadcast %cst_64 : f32 to vector<1x126xf32>
    %148 = arith.cmpf one, %146, %147 : vector<1x126xf32>
    %149 = arith.andi %148, %11 : vector<1x126xi1>
    %cst_65 = arith.constant 0.000000e+00 : f32
    %150 = vector.broadcast %cst_65 : f32 to vector<1x126xf32>
    %151 = arith.select %149, %146, %150 : vector<1x126xi1>, vector<1x126xf32>
    %cst_66 = arith.constant 0.00999999977 : f32
    %cst_67 = arith.constant 2.560000e+02 : f32
    %152 = vector.broadcast %cst_66 : f32 to vector<1x126xf32>
    %153 = arith.maximumf %152, %151 : vector<1x126xf32>
    %154 = vector.broadcast %cst_67 : f32 to vector<1x126xf32>
    %155 = arith.minimumf %154, %153 : vector<1x126xf32>
    %156 = vector.broadcast %1 : f32 to vector<1x126xf32>
    %157 = arith.divf %156, %155 : vector<1x126xf32>
    %158 = arith.subf %157, %26 : vector<1x126xf32>
    %159 = math.absf %158 : vector<1x126xf32>
    %160 = arith.cmpf ole, %159, %25 : vector<1x126xf32>
    %161 = arith.subf %157, %19 : vector<1x126xf32>
    %162 = math.absf %161 : vector<1x126xf32>
    %163 = arith.cmpf ole, %162, %25 : vector<1x126xf32>
    %cst_68 = arith.constant dense<true> : vector<1x126xi1>
    %164 = arith.xori %149, %cst_68 : vector<1x126xi1>
    %165 = arith.ori %163, %164 : vector<1x126xi1>
    %166 = arith.subf %157, %27 : vector<1x126xf32>
    %167 = math.absf %166 : vector<1x126xf32>
    %168 = arith.cmpf ole, %167, %25 : vector<1x126xf32>
    %c0_69 = arith.constant 0 : index
    %c0_70 = arith.constant 0 : index
    %c0_71 = arith.constant 0 : index
    %c18_72 = arith.constant 18 : index
    %169 = vector.load %arg4[%c0_69, %c0_70, %c0_71, %c18_72] : memref<1x1x4x180xf32, #tpu.memory_space<vmem>>, vector<1x1x4x126xf32>
    %170 = vector.shape_cast %169 : vector<1x1x4x126xf32> to vector<4x126xf32>
    %cst_73 = arith.constant 0.000000e+00 : f32
    %171 = vector.broadcast %cst_73 : f32 to vector<4x126xf32>
    %172 = vector.shape_cast %160 : vector<1x126xi1> to vector<1x126xi1>
    %173 = vector.broadcast %172 : vector<1x126xi1> to vector<4x126xi1>
    %174 = arith.select %173, %170, %171 : vector<4x126xi1>, vector<4x126xf32>
    %c12 = arith.constant 12 : index
    %c0_74 = arith.constant 0 : index
    %175 = vector.load %arg9[%c12, %c0_74] : memref<120x126xf32, #tpu.memory_space<vmem>>, vector<4x126xf32>
    tpu.vector_store %arg9[%c12, %c0_74], %174 {strides = array<i32>} : memref<120x126xf32, #tpu.memory_space<vmem>>, vector<4x126xf32>,
    %176 = vector.shape_cast %165 : vector<1x126xi1> to vector<1x126xi1>
    %177 = vector.broadcast %176 : vector<1x126xi1> to vector<4x126xi1>
    %178 = arith.select %177, %170, %171 : vector<4x126xi1>, vector<4x126xf32>
    %c52 = arith.constant 52 : index
    %c0_75 = arith.constant 0 : index
    %179 = vector.load %arg9[%c52, %c0_75] : memref<120x126xf32, #tpu.memory_space<vmem>>, vector<4x126xf32>
    tpu.vector_store %arg9[%c52, %c0_75], %178 {strides = array<i32>} : memref<120x126xf32, #tpu.memory_space<vmem>>, vector<4x126xf32>,
    %180 = vector.shape_cast %168 : vector<1x126xi1> to vector<1x126xi1>
    %181 = vector.broadcast %180 : vector<1x126xi1> to vector<4x126xi1>
    %182 = arith.select %181, %170, %171 : vector<4x126xi1>, vector<4x126xf32>
    %c92 = arith.constant 92 : index
    %c0_76 = arith.constant 0 : index
    %183 = vector.load %arg9[%c92, %c0_76] : memref<120x126xf32, #tpu.memory_space<vmem>>, vector<4x126xf32>
    tpu.vector_store %arg9[%c92, %c0_76], %182 {strides = array<i32>} : memref<120x126xf32, #tpu.memory_space<vmem>>, vector<4x126xf32>,
    %c0_77 = arith.constant 0 : index
    %c0_78 = arith.constant 0 : index
    %c0_79 = arith.constant 0 : index
    %c19_80 = arith.constant 19 : index
    %184 = vector.load %arg5[%c0_77, %c0_78, %c0_79, %c19_80] : memref<1x1x1x180xf32, #tpu.memory_space<vmem>>, vector<1x1x1x126xf32>
    %185 = vector.shape_cast %184 : vector<1x1x1x126xf32> to vector<1x126xf32>
    %cst_81 = arith.constant 0.000000e+00 : f32
    %186 = vector.broadcast %cst_81 : f32 to vector<1x126xf32>
    %187 = arith.cmpf one, %185, %186 : vector<1x126xf32>
    %188 = arith.andi %187, %11 : vector<1x126xi1>
    %cst_82 = arith.constant 0.000000e+00 : f32
    %189 = vector.broadcast %cst_82 : f32 to vector<1x126xf32>
    %190 = arith.select %188, %185, %189 : vector<1x126xi1>, vector<1x126xf32>
    %cst_83 = arith.constant 0.00999999977 : f32
    %cst_84 = arith.constant 2.560000e+02 : f32
    %191 = vector.broadcast %cst_83 : f32 to vector<1x126xf32>
    %192 = arith.maximumf %191, %190 : vector<1x126xf32>
    %193 = vector.broadcast %cst_84 : f32 to vector<1x126xf32>
    %194 = arith.minimumf %193, %192 : vector<1x126xf32>
    %195 = vector.broadcast %1 : f32 to vector<1x126xf32>
    %196 = arith.divf %195, %194 : vector<1x126xf32>
    %197 = arith.subf %196, %26 : vector<1x126xf32>
    %198 = math.absf %197 : vector<1x126xf32>
    %199 = arith.cmpf ole, %198, %25 : vector<1x126xf32>
    %200 = arith.subf %196, %19 : vector<1x126xf32>
    %201 = math.absf %200 : vector<1x126xf32>
    %202 = arith.cmpf ole, %201, %25 : vector<1x126xf32>
    %cst_85 = arith.constant dense<true> : vector<1x126xi1>
    %203 = arith.xori %188, %cst_85 : vector<1x126xi1>
    %204 = arith.ori %202, %203 : vector<1x126xi1>
    %205 = arith.subf %196, %27 : vector<1x126xf32>
    %206 = math.absf %205 : vector<1x126xf32>
    %207 = arith.cmpf ole, %206, %25 : vector<1x126xf32>
    %c0_86 = arith.constant 0 : index
    %c0_87 = arith.constant 0 : index
    %c0_88 = arith.constant 0 : index
    %c19_89 = arith.constant 19 : index
    %208 = vector.load %arg4[%c0_86, %c0_87, %c0_88, %c19_89] : memref<1x1x4x180xf32, #tpu.memory_space<vmem>>, vector<1x1x4x126xf32>
    %209 = vector.shape_cast %208 : vector<1x1x4x126xf32> to vector<4x126xf32>
    %cst_90 = arith.constant 0.000000e+00 : f32
    %210 = vector.broadcast %cst_90 : f32 to vector<4x126xf32>
    %211 = vector.shape_cast %199 : vector<1x126xi1> to vector<1x126xi1>
    %212 = vector.broadcast %211 : vector<1x126xi1> to vector<4x126xi1>
    %213 = arith.select %212, %209, %210 : vector<4x126xi1>, vector<4x126xf32>
    %c16 = arith.constant 16 : index
    %c0_91 = arith.constant 0 : index
    %214 = vector.load %arg9[%c16, %c0_91] : memref<120x126xf32, #tpu.memory_space<vmem>>, vector<4x126xf32>
    tpu.vector_store %arg9[%c16, %c0_91], %213 {strides = array<i32>} : memref<120x126xf32, #tpu.memory_space<vmem>>, vector<4x126xf32>,
    %215 = vector.shape_cast %204 : vector<1x126xi1> to vector<1x126xi1>
    %216 = vector.broadcast %215 : vector<1x126xi1> to vector<4x126xi1>
    %217 = arith.select %216, %209, %210 : vector<4x126xi1>, vector<4x126xf32>
    %c56 = arith.constant 56 : index
    %c0_92 = arith.constant 0 : index
    %218 = vector.load %arg9[%c56, %c0_92] : memref<120x126xf32, #tpu.memory_space<vmem>>, vector<4x126xf32>
    tpu.vector_store %arg9[%c56, %c0_92], %217 {strides = array<i32>} : memref<120x126xf32, #tpu.memory_space<vmem>>, vector<4x126xf32>,
    %219 = vector.shape_cast %207 : vector<1x126xi1> to vector<1x126xi1>
    %220 = vector.broadcast %219 : vector<1x126xi1> to vector<4x126xi1>
    %221 = arith.select %220, %209, %210 : vector<4x126xi1>, vector<4x126xf32>
    %c96 = arith.constant 96 : index
    %c0_93 = arith.constant 0 : index
    %222 = vector.load %arg9[%c96, %c0_93] : memref<120x126xf32, #tpu.memory_space<vmem>>, vector<4x126xf32>
    tpu.vector_store %arg9[%c96, %c0_93], %221 {strides = array<i32>} : memref<120x126xf32, #tpu.memory_space<vmem>>, vector<4x126xf32>,
    %c0_94 = arith.constant 0 : index
    %c0_95 = arith.constant 0 : index
    %c0_96 = arith.constant 0 : index
    %c20 = arith.constant 20 : index
    %223 = vector.load %arg5[%c0_94, %c0_95, %c0_96, %c20] : memref<1x1x1x180xf32, #tpu.memory_space<vmem>>, vector<1x1x1x126xf32>
    %224 = vector.shape_cast %223 : vector<1x1x1x126xf32> to vector<1x126xf32>
    %cst_97 = arith.constant 0.000000e+00 : f32
    %225 = vector.broadcast %cst_97 : f32 to vector<1x126xf32>
    %226 = arith.cmpf one, %224, %225 : vector<1x126xf32>
    %227 = arith.andi %226, %11 : vector<1x126xi1>
    %cst_98 = arith.constant 0.000000e+00 : f32
    %228 = vector.broadcast %cst_98 : f32 to vector<1x126xf32>
    %229 = arith.select %227, %224, %228 : vector<1x126xi1>, vector<1x126xf32>
    %cst_99 = arith.constant 0.00999999977 : f32
    %cst_100 = arith.constant 2.560000e+02 : f32
    %230 = vector.broadcast %cst_99 : f32 to vector<1x126xf32>
    %231 = arith.maximumf %230, %229 : vector<1x126xf32>
    %232 = vector.broadcast %cst_100 : f32 to vector<1x126xf32>
    %233 = arith.minimumf %232, %231 : vector<1x126xf32>
    %234 = vector.broadcast %1 : f32 to vector<1x126xf32>
    %235 = arith.divf %234, %233 : vector<1x126xf32>
    %236 = arith.subf %235, %26 : vector<1x126xf32>
    %237 = math.absf %236 : vector<1x126xf32>
    %238 = arith.cmpf ole, %237, %25 : vector<1x126xf32>
    %239 = arith.subf %235, %19 : vector<1x126xf32>
    %240 = math.absf %239 : vector<1x126xf32>
    %241 = arith.cmpf ole, %240, %25 : vector<1x126xf32>
    %cst_101 = arith.constant dense<true> : vector<1x126xi1>
    %242 = arith.xori %227, %cst_101 : vector<1x126xi1>
    %243 = arith.ori %241, %242 : vector<1x126xi1>
    %244 = arith.subf %235, %27 : vector<1x126xf32>
    %245 = math.absf %244 : vector<1x126xf32>
    %246 = arith.cmpf ole, %245, %25 : vector<1x126xf32>
    %c0_102 = arith.constant 0 : index
    %c0_103 = arith.constant 0 : index
    %c0_104 = arith.constant 0 : index
    %c20_105 = arith.constant 20 : index
    %247 = vector.load %arg4[%c0_102, %c0_103, %c0_104, %c20_105] : memref<1x1x4x180xf32, #tpu.memory_space<vmem>>, vector<1x1x4x126xf32>
    %248 = vector.shape_cast %247 : vector<1x1x4x126xf32> to vector<4x126xf32>
    %cst_106 = arith.constant 0.000000e+00 : f32
    %249 = vector.broadcast %cst_106 : f32 to vector<4x126xf32>
    %250 = vector.shape_cast %238 : vector<1x126xi1> to vector<1x126xi1>
    %251 = vector.broadcast %250 : vector<1x126xi1> to vector<4x126xi1>
    %252 = arith.select %251, %248, %249 : vector<4x126xi1>, vector<4x126xf32>
    %c20_107 = arith.constant 20 : index
    %c0_108 = arith.constant 0 : index
    %253 = vector.load %arg9[%c20_107, %c0_108] : memref<120x126xf32, #tpu.memory_space<vmem>>, vector<4x126xf32>
    tpu.vector_store %arg9[%c20_107, %c0_108], %252 {strides = array<i32>} : memref<120x126xf32, #tpu.memory_space<vmem>>, vector<4x126xf32>,
    %254 = vector.shape_cast %243 : vector<1x126xi1> to vector<1x126xi1>
    %255 = vector.broadcast %254 : vector<1x126xi1> to vector<4x126xi1>
    %256 = arith.select %255, %248, %249 : vector<4x126xi1>, vector<4x126xf32>
    %c60 = arith.constant 60 : index
    %c0_109 = arith.constant 0 : index
    %257 = vector.load %arg9[%c60, %c0_109] : memref<120x126xf32, #tpu.memory_space<vmem>>, vector<4x126xf32>
    tpu.vector_store %arg9[%c60, %c0_109], %256 {strides = array<i32>} : memref<120x126xf32, #tpu.memory_space<vmem>>, vector<4x126xf32>,
    %258 = vector.shape_cast %246 : vector<1x126xi1> to vector<1x126xi1>
    %259 = vector.broadcast %258 : vector<1x126xi1> to vector<4x126xi1>
    %260 = arith.select %259, %248, %249 : vector<4x126xi1>, vector<4x126xf32>
    %c100 = arith.constant 100 : index
    %c0_110 = arith.constant 0 : index
    %261 = vector.load %arg9[%c100, %c0_110] : memref<120x126xf32, #tpu.memory_space<vmem>>, vector<4x126xf32>
    tpu.vector_store %arg9[%c100, %c0_110], %260 {strides = array<i32>} : memref<120x126xf32, #tpu.memory_space<vmem>>, vector<4x126xf32>,
    %c0_111 = arith.constant 0 : index
    %c0_112 = arith.constant 0 : index
    %c0_113 = arith.constant 0 : index
    %c36_114 = arith.constant 36 : index
    %262 = vector.load %arg5[%c0_111, %c0_112, %c0_113, %c36_114] : memref<1x1x1x180xf32, #tpu.memory_space<vmem>>, vector<1x1x1x126xf32>
    %263 = vector.shape_cast %262 : vector<1x1x1x126xf32> to vector<1x126xf32>
    %cst_115 = arith.constant 0.000000e+00 : f32
    %264 = vector.broadcast %cst_115 : f32 to vector<1x126xf32>
    %265 = arith.cmpf one, %263, %264 : vector<1x126xf32>
    %266 = arith.andi %265, %11 : vector<1x126xi1>
    %cst_116 = arith.constant 0.000000e+00 : f32
    %267 = vector.broadcast %cst_116 : f32 to vector<1x126xf32>
    %268 = arith.select %266, %263, %267 : vector<1x126xi1>, vector<1x126xf32>
    %cst_117 = arith.constant 0.00999999977 : f32
    %cst_118 = arith.constant 2.560000e+02 : f32
    %269 = vector.broadcast %cst_117 : f32 to vector<1x126xf32>
    %270 = arith.maximumf %269, %268 : vector<1x126xf32>
    %271 = vector.broadcast %cst_118 : f32 to vector<1x126xf32>
    %272 = arith.minimumf %271, %270 : vector<1x126xf32>
    %273 = vector.broadcast %1 : f32 to vector<1x126xf32>
    %274 = arith.divf %273, %272 : vector<1x126xf32>
    %275 = arith.subf %274, %26 : vector<1x126xf32>
    %276 = math.absf %275 : vector<1x126xf32>
    %277 = arith.cmpf ole, %276, %25 : vector<1x126xf32>
    %278 = arith.subf %274, %19 : vector<1x126xf32>
    %279 = math.absf %278 : vector<1x126xf32>
    %280 = arith.cmpf ole, %279, %25 : vector<1x126xf32>
    %cst_119 = arith.constant dense<true> : vector<1x126xi1>
    %281 = arith.xori %266, %cst_119 : vector<1x126xi1>
    %282 = arith.ori %280, %281 : vector<1x126xi1>
    %283 = arith.subf %274, %27 : vector<1x126xf32>
    %284 = math.absf %283 : vector<1x126xf32>
    %285 = arith.cmpf ole, %284, %25 : vector<1x126xf32>
    %c0_120 = arith.constant 0 : index
    %c0_121 = arith.constant 0 : index
    %c0_122 = arith.constant 0 : index
    %c36_123 = arith.constant 36 : index
    %286 = vector.load %arg4[%c0_120, %c0_121, %c0_122, %c36_123] : memref<1x1x4x180xf32, #tpu.memory_space<vmem>>, vector<1x1x4x126xf32>
    %287 = vector.shape_cast %286 : vector<1x1x4x126xf32> to vector<4x126xf32>
    %cst_124 = arith.constant 0.000000e+00 : f32
    %288 = vector.broadcast %cst_124 : f32 to vector<4x126xf32>
    %289 = vector.shape_cast %277 : vector<1x126xi1> to vector<1x126xi1>
    %290 = vector.broadcast %289 : vector<1x126xi1> to vector<4x126xi1>
    %291 = arith.select %290, %287, %288 : vector<4x126xi1>, vector<4x126xf32>
    %c24 = arith.constant 24 : index
    %c0_125 = arith.constant 0 : index
    %292 = vector.load %arg9[%c24, %c0_125] : memref<120x126xf32, #tpu.memory_space<vmem>>, vector<4x126xf32>
    tpu.vector_store %arg9[%c24, %c0_125], %291 {strides = array<i32>} : memref<120x126xf32, #tpu.memory_space<vmem>>, vector<4x126xf32>,
    %293 = vector.shape_cast %282 : vector<1x126xi1> to vector<1x126xi1>
    %294 = vector.broadcast %293 : vector<1x126xi1> to vector<4x126xi1>
    %295 = arith.select %294, %287, %288 : vector<4x126xi1>, vector<4x126xf32>
    %c64 = arith.constant 64 : index
    %c0_126 = arith.constant 0 : index
    %296 = vector.load %arg9[%c64, %c0_126] : memref<120x126xf32, #tpu.memory_space<vmem>>, vector<4x126xf32>
    tpu.vector_store %arg9[%c64, %c0_126], %295 {strides = array<i32>} : memref<120x126xf32, #tpu.memory_space<vmem>>, vector<4x126xf32>,
    %297 = vector.shape_cast %285 : vector<1x126xi1> to vector<1x126xi1>
    %298 = vector.broadcast %297 : vector<1x126xi1> to vector<4x126xi1>
    %299 = arith.select %298, %287, %288 : vector<4x126xi1>, vector<4x126xf32>
    %c104 = arith.constant 104 : index
    %c0_127 = arith.constant 0 : index
    %300 = vector.load %arg9[%c104, %c0_127] : memref<120x126xf32, #tpu.memory_space<vmem>>, vector<4x126xf32>
    tpu.vector_store %arg9[%c104, %c0_127], %299 {strides = array<i32>} : memref<120x126xf32, #tpu.memory_space<vmem>>, vector<4x126xf32>,
    %c0_128 = arith.constant 0 : index
    %c0_129 = arith.constant 0 : index
    %c0_130 = arith.constant 0 : index
    %c37 = arith.constant 37 : index
    %301 = vector.load %arg5[%c0_128, %c0_129, %c0_130, %c37] : memref<1x1x1x180xf32, #tpu.memory_space<vmem>>, vector<1x1x1x126xf32>
    %302 = vector.shape_cast %301 : vector<1x1x1x126xf32> to vector<1x126xf32>
    %cst_131 = arith.constant 0.000000e+00 : f32
    %303 = vector.broadcast %cst_131 : f32 to vector<1x126xf32>
    %304 = arith.cmpf one, %302, %303 : vector<1x126xf32>
    %305 = arith.andi %304, %11 : vector<1x126xi1>
    %cst_132 = arith.constant 0.000000e+00 : f32
    %306 = vector.broadcast %cst_132 : f32 to vector<1x126xf32>
    %307 = arith.select %305, %302, %306 : vector<1x126xi1>, vector<1x126xf32>
    %cst_133 = arith.constant 0.00999999977 : f32
    %cst_134 = arith.constant 2.560000e+02 : f32
    %308 = vector.broadcast %cst_133 : f32 to vector<1x126xf32>
    %309 = arith.maximumf %308, %307 : vector<1x126xf32>
    %310 = vector.broadcast %cst_134 : f32 to vector<1x126xf32>
    %311 = arith.minimumf %310, %309 : vector<1x126xf32>
    %312 = vector.broadcast %1 : f32 to vector<1x126xf32>
    %313 = arith.divf %312, %311 : vector<1x126xf32>
    %314 = arith.subf %313, %26 : vector<1x126xf32>
    %315 = math.absf %314 : vector<1x126xf32>
    %316 = arith.cmpf ole, %315, %25 : vector<1x126xf32>
    %317 = arith.subf %313, %19 : vector<1x126xf32>
    %318 = math.absf %317 : vector<1x126xf32>
    %319 = arith.cmpf ole, %318, %25 : vector<1x126xf32>
    %cst_135 = arith.constant dense<true> : vector<1x126xi1>
    %320 = arith.xori %305, %cst_135 : vector<1x126xi1>
    %321 = arith.ori %319, %320 : vector<1x126xi1>
    %322 = arith.subf %313, %27 : vector<1x126xf32>
    %323 = math.absf %322 : vector<1x126xf32>
    %324 = arith.cmpf ole, %323, %25 : vector<1x126xf32>
    %c0_136 = arith.constant 0 : index
    %c0_137 = arith.constant 0 : index
    %c0_138 = arith.constant 0 : index
    %c37_139 = arith.constant 37 : index
    %325 = vector.load %arg4[%c0_136, %c0_137, %c0_138, %c37_139] : memref<1x1x4x180xf32, #tpu.memory_space<vmem>>, vector<1x1x4x126xf32>
    %326 = vector.shape_cast %325 : vector<1x1x4x126xf32> to vector<4x126xf32>
    %cst_140 = arith.constant 0.000000e+00 : f32
    %327 = vector.broadcast %cst_140 : f32 to vector<4x126xf32>
    %328 = vector.shape_cast %316 : vector<1x126xi1> to vector<1x126xi1>
    %329 = vector.broadcast %328 : vector<1x126xi1> to vector<4x126xi1>
    %330 = arith.select %329, %326, %327 : vector<4x126xi1>, vector<4x126xf32>
    %c28 = arith.constant 28 : index
    %c0_141 = arith.constant 0 : index
    %331 = vector.load %arg9[%c28, %c0_141] : memref<120x126xf32, #tpu.memory_space<vmem>>, vector<4x126xf32>
    tpu.vector_store %arg9[%c28, %c0_141], %330 {strides = array<i32>} : memref<120x126xf32, #tpu.memory_space<vmem>>, vector<4x126xf32>,
    %332 = vector.shape_cast %321 : vector<1x126xi1> to vector<1x126xi1>
    %333 = vector.broadcast %332 : vector<1x126xi1> to vector<4x126xi1>
    %334 = arith.select %333, %326, %327 : vector<4x126xi1>, vector<4x126xf32>
    %c68 = arith.constant 68 : index
    %c0_142 = arith.constant 0 : index
    %335 = vector.load %arg9[%c68, %c0_142] : memref<120x126xf32, #tpu.memory_space<vmem>>, vector<4x126xf32>
    tpu.vector_store %arg9[%c68, %c0_142], %334 {strides = array<i32>} : memref<120x126xf32, #tpu.memory_space<vmem>>, vector<4x126xf32>,
    %336 = vector.shape_cast %324 : vector<1x126xi1> to vector<1x126xi1>
    %337 = vector.broadcast %336 : vector<1x126xi1> to vector<4x126xi1>
    %338 = arith.select %337, %326, %327 : vector<4x126xi1>, vector<4x126xf32>
    %c108 = arith.constant 108 : index
    %c0_143 = arith.constant 0 : index
    %339 = vector.load %arg9[%c108, %c0_143] : memref<120x126xf32, #tpu.memory_space<vmem>>, vector<4x126xf32>
    tpu.vector_store %arg9[%c108, %c0_143], %338 {strides = array<i32>} : memref<120x126xf32, #tpu.memory_space<vmem>>, vector<4x126xf32>,
    %c0_144 = arith.constant 0 : index
    %c0_145 = arith.constant 0 : index
    %c0_146 = arith.constant 0 : index
    %c38 = arith.constant 38 : index
    %340 = vector.load %arg5[%c0_144, %c0_145, %c0_146, %c38] : memref<1x1x1x180xf32, #tpu.memory_space<vmem>>, vector<1x1x1x126xf32>
    %341 = vector.shape_cast %340 : vector<1x1x1x126xf32> to vector<1x126xf32>
    %cst_147 = arith.constant 0.000000e+00 : f32
    %342 = vector.broadcast %cst_147 : f32 to vector<1x126xf32>
    %343 = arith.cmpf one, %341, %342 : vector<1x126xf32>
    %344 = arith.andi %343, %11 : vector<1x126xi1>
    %cst_148 = arith.constant 0.000000e+00 : f32
    %345 = vector.broadcast %cst_148 : f32 to vector<1x126xf32>
    %346 = arith.select %344, %341, %345 : vector<1x126xi1>, vector<1x126xf32>
    %cst_149 = arith.constant 0.00999999977 : f32
    %cst_150 = arith.constant 2.560000e+02 : f32
    %347 = vector.broadcast %cst_149 : f32 to vector<1x126xf32>
    %348 = arith.maximumf %347, %346 : vector<1x126xf32>
    %349 = vector.broadcast %cst_150 : f32 to vector<1x126xf32>
    %350 = arith.minimumf %349, %348 : vector<1x126xf32>
    %351 = vector.broadcast %1 : f32 to vector<1x126xf32>
    %352 = arith.divf %351, %350 : vector<1x126xf32>
    %353 = arith.subf %352, %26 : vector<1x126xf32>
    %354 = math.absf %353 : vector<1x126xf32>
    %355 = arith.cmpf ole, %354, %25 : vector<1x126xf32>
    %356 = arith.subf %352, %19 : vector<1x126xf32>
    %357 = math.absf %356 : vector<1x126xf32>
    %358 = arith.cmpf ole, %357, %25 : vector<1x126xf32>
    %cst_151 = arith.constant dense<true> : vector<1x126xi1>
    %359 = arith.xori %344, %cst_151 : vector<1x126xi1>
    %360 = arith.ori %358, %359 : vector<1x126xi1>
    %361 = arith.subf %352, %27 : vector<1x126xf32>
    %362 = math.absf %361 : vector<1x126xf32>
    %363 = arith.cmpf ole, %362, %25 : vector<1x126xf32>
    %c0_152 = arith.constant 0 : index
    %c0_153 = arith.constant 0 : index
    %c0_154 = arith.constant 0 : index
    %c38_155 = arith.constant 38 : index
    %364 = vector.load %arg4[%c0_152, %c0_153, %c0_154, %c38_155] : memref<1x1x4x180xf32, #tpu.memory_space<vmem>>, vector<1x1x4x126xf32>
    %365 = vector.shape_cast %364 : vector<1x1x4x126xf32> to vector<4x126xf32>
    %cst_156 = arith.constant 0.000000e+00 : f32
    %366 = vector.broadcast %cst_156 : f32 to vector<4x126xf32>
    %367 = vector.shape_cast %355 : vector<1x126xi1> to vector<1x126xi1>
    %368 = vector.broadcast %367 : vector<1x126xi1> to vector<4x126xi1>
    %369 = arith.select %368, %365, %366 : vector<4x126xi1>, vector<4x126xf32>
    %c32 = arith.constant 32 : index
    %c0_157 = arith.constant 0 : index
    %370 = vector.load %arg9[%c32, %c0_157] : memref<120x126xf32, #tpu.memory_space<vmem>>, vector<4x126xf32>
    tpu.vector_store %arg9[%c32, %c0_157], %369 {strides = array<i32>} : memref<120x126xf32, #tpu.memory_space<vmem>>, vector<4x126xf32>,
    %371 = vector.shape_cast %360 : vector<1x126xi1> to vector<1x126xi1>
    %372 = vector.broadcast %371 : vector<1x126xi1> to vector<4x126xi1>
    %373 = arith.select %372, %365, %366 : vector<4x126xi1>, vector<4x126xf32>
    %c72 = arith.constant 72 : index
    %c0_158 = arith.constant 0 : index
    %374 = vector.load %arg9[%c72, %c0_158] : memref<120x126xf32, #tpu.memory_space<vmem>>, vector<4x126xf32>
    tpu.vector_store %arg9[%c72, %c0_158], %373 {strides = array<i32>} : memref<120x126xf32, #tpu.memory_space<vmem>>, vector<4x126xf32>,
    %375 = vector.shape_cast %363 : vector<1x126xi1> to vector<1x126xi1>
    %376 = vector.broadcast %375 : vector<1x126xi1> to vector<4x126xi1>
    %377 = arith.select %376, %365, %366 : vector<4x126xi1>, vector<4x126xf32>
    %c112 = arith.constant 112 : index
    %c0_159 = arith.constant 0 : index
    %378 = vector.load %arg9[%c112, %c0_159] : memref<120x126xf32, #tpu.memory_space<vmem>>, vector<4x126xf32>
    tpu.vector_store %arg9[%c112, %c0_159], %377 {strides = array<i32>} : memref<120x126xf32, #tpu.memory_space<vmem>>, vector<4x126xf32>,
    %c0_160 = arith.constant 0 : index
    %c0_161 = arith.constant 0 : index
    %379 = vector.load %arg6[%c0_160, %c0_161] : memref<8x120xf32, #tpu.memory_space<vmem>>, vector<8x120xf32>
    %c0_162 = arith.constant 0 : index
    %c0_163 = arith.constant 0 : index
    %380 = vector.load %arg9[%c0_162, %c0_163] : memref<120x126xf32, #tpu.memory_space<vmem>>, vector<120x126xf32>
    %cst_164 = arith.constant dense<0.000000e+00> : vector<8x126xf32>
    %381 = tpu.matmul %379, %380, %cst_164 {dimension_numbers = #tpu.dot_dimension_numbers<[1], [0], [0], [1], [0, 0, 1, 1], [], []>} : vector<8x120xf32>, vector<120x126xf32>, vector<8x126xf32> -> vector<8x126xf32>
    %c0_165 = arith.constant 0 : index
    %c0_166 = arith.constant 0 : index
    %382 = vector.load %arg7[%c0_165, %c0_166] : memref<8x1xf32, #tpu.memory_space<vmem>>, vector<8x1xf32>
    %383 = vector.broadcast %382 : vector<8x1xf32> to vector<8x126xf32>
    %384 = arith.addf %381, %383 : vector<8x126xf32>
    %c0_167 = arith.constant 0 : index
    %c0_168 = arith.constant 0 : index
    %c0_169 = arith.constant 0 : index
    %c0_170 = arith.constant 0 : index
    %385 = vector.load %arg8[%c0_167, %c0_168, %c0_169, %c0_170] : memref<1x1x8x126xf32, #tpu.memory_space<vmem>>, vector<1x1x8x126xf32>
    %386 = vector.shape_cast %385 : vector<1x1x8x126xf32> to vector<8x126xf32>
    %387 = vector.shape_cast %384 : vector<8x126xf32> to vector<1x1x8x126xf32>
    tpu.vector_store %arg8[%c0_167, %c0_168, %c0_169, %c0_170], %387 {strides = array<i32>} : memref<1x1x8x126xf32, #tpu.memory_space<vmem>>, vector<1x1x8x126xf32>,
    return
  }
  func.func @transform_0(%arg0: i32, %arg1: i32) -> i32 {
    %c0_i32 = arith.constant 0 : i32
    %c0_i32_0 = arith.constant 0 : i32
    return %c0_i32 : i32
  }
  func.func @transform_1(%arg0: i32, %arg1: i32) -> i32 {
    %c0_i32 = arith.constant 0 : i32
    %c0_i32_0 = arith.constant 0 : i32
    return %c0_i32 : i32
  }
  func.func @transform_2(%arg0: i32, %arg1: i32) -> (i32, i32, i32, i32) {
    %c0_i32 = arith.constant 0 : i32
    %c0_i32_0 = arith.constant 0 : i32
    %c0_i32_1 = arith.constant 0 : i32
    return %arg0, %arg1, %c0_i32, %c0_i32_0 : i32, i32, i32, i32
  }
  func.func @transform_3(%arg0: i32, %arg1: i32) -> (i32, i32, i32, i32) {
    %c0_i32 = arith.constant 0 : i32
    %c0_i32_0 = arith.constant 0 : i32
    %c0_i32_1 = arith.constant 0 : i32
    return %arg0, %arg1, %c0_i32, %c0_i32_0 : i32, i32, i32, i32
  }
  func.func @transform_4(%arg0: i32, %arg1: i32) -> (i32, i32) {
    %c0_i32 = arith.constant 0 : i32
    %c0_i32_0 = arith.constant 0 : i32
    %c0_i32_1 = arith.constant 0 : i32
    return %c0_i32, %c0_i32_0 : i32, i32
  }
  func.func @transform_5(%arg0: i32, %arg1: i32) -> (i32, i32) {
    %c0_i32 = arith.constant 0 : i32
    %c0_i32_0 = arith.constant 0 : i32
    %c0_i32_1 = arith.constant 0 : i32
    return %c0_i32, %c0_i32_0 : i32, i32
  }
  func.func @transform_6(%arg0: i32, %arg1: i32) -> (i32, i32, i32, i32) {
    %c0_i32 = arith.constant 0 : i32
    %c0_i32_0 = arith.constant 0 : i32
    %c0_i32_1 = arith.constant 0 : i32
    return %arg0, %arg1, %c0_i32, %c0_i32_0 : i32, i32, i32, i32
  }
}

</mosaic_0001>

<llo_original>
// kernel: tpu_custom_call.1
$region0: #{tpu_custom_call.1}
  #allocation0 [shape = 'u32[]', space=smem, size = 0x4, offset = 0x4, fixed_abs, tag = 'smem constant byte address 0x4 - core index']
  #allocation1 [shape = 'u32[144,128]{1,0:T(1,128)}', space=vmem, size = 0x12000, scoped, tag = 'internal scratch']
  #allocation2 [shape = 'f32[120,126]{1,0:T(8,128)}', space=vmem, size = 0xf000, scoped, tag = 'scratch operand']
  %s0 = inlined_call_operand.vmem [shape: f32[2], index: 0, kind: input, shape index: {}]
  %s1 = inlined_call_operand.vmem [shape: f32[2], index: 1, kind: input, shape index: {}]
  %s2 = inlined_call_operand.hbm [shape: f32[2,3,4,180], index: 2, kind: input, shape index: {}]
  %s3 = inlined_call_operand.vmem [shape: f32[2,3,1,180], index: 3, kind: input, shape index: {}]
  %s4 = inlined_call_operand.hbm [shape: f32[8,120], index: 4, kind: input, shape index: {}]
  %s5 = inlined_call_operand.vmem [shape: f32[8,1], index: 5, kind: input, shape index: {}]
  %s6 = inlined_call_operand.hbm [shape: f32[2,3,8,126], index: 6, kind: output, shape index: {}]
  %s7 = sld [smem:[#allocation0]]
  $region73: #{tpu_custom_call.1} parent=0
    _
  %s9 = ssub.s32 1, %s7
  %s10 = scalar_select 0, %s9, %s7
  $region1: #{tpu_custom_call.1} parent=0
    #allocation3 [shape = 'u8[512]{0}', space=smem, size = 0x200, scoped, tag = 'input window, operand 0, single buffered']
    #allocation4 [shape = 's32[2]{0}', space=sflag, size = 0x8, scoped, tag = 'scoped memory for tpu_custom_call.1']
    #allocation5 [shape = 's32[2]{0}', space=sflag, size = 0x8, scoped, tag = 'scoped memory for tpu_custom_call.1']
    #allocation6 [shape = 's32[2]{0}', space=sflag, size = 0x8, scoped, tag = 'scoped memory for tpu_custom_call.1']
    #allocation7 [shape = 'u8[512]{0}', space=smem, size = 0x200, scoped, tag = 'input window, operand 1, single buffered']
    #allocation8 [shape = 's32[1]{0}', space=sflag, size = 0x4, scoped, tag = 'scoped memory for tpu_custom_call.1']
    #allocation9 [shape = 'u8[8192]{0}', space=vmem, size = 0x2000, scoped, tag = 'input window, operand 2']
    #allocation10 [shape = 'u8[4096]{0}', space=vmem, size = 0x1000, scoped, tag = 'input window, operand 4, single buffered']
    #allocation11 [shape = 's32[1]{0}', space=sflag, size = 0x4, scoped, tag = 'scoped memory for tpu_custom_call.1']
    #allocation12 [shape = 'u8[8192]{0}', space=vmem, size = 0x2000, scoped, tag = 'output window, operand 0']
    %11 = vsyncpa [#allocation6], 0
    %12 = vsyncpa [#allocation8], 0
    %13 = vsyncpa [#allocation4], 0
    %s14 = scalar_lea.sflag [#allocation4], 1
    %15 = vsyncpa %s14, 0
    %16 = vsyncpa [#allocation11], 0
    %17 = vsyncpa [#allocation5], 0
    %s18 = scalar_lea.sflag [#allocation5], 1
    %19 = vsyncpa %s18, 0
    loop: start=0, step=1, limit=8
    $region2: #{tpu_custom_call.1} parent=1 // loop_pre_header
      _
    $region3: #{tpu_custom_call.1} parent=1 // loop_header
      %s21 = sphi 0, %s25
      %p22 = scmp.ge.s32.totalorder %s21, 8
      %s28 = sphi 0, %s40
      %s29 = sphi 0, %s36
      %s30 = sphi 0, %s28
      %s31 = sphi 0, %s29
      %s32 = sphi 0, %s30
      %s33 = sphi 0, %s31
      %s41 = sphi 0, %s41
      %s43 = sphi 0, %s41
      %s44 = sphi 0, %s43
      %s58 = sphi 0, %s44
      %s62 = sphi 0, %s62
      %s64 = sphi 0, %s62
      %s65 = sphi 0, %s64
      %s79 = sphi 0, %s65
      %s87 = sphi 0, %s89
      %s90 = sphi 0, %s87
      %s91 = sphi 0, %s90
      %s107 = sphi 0, %s91
      %s115 = sphi 0, %s117
      %s118 = sphi 0, %s115
      %s119 = sphi 0, %s118
      %s135 = sphi 0, %s119
      %s139 = sphi 0, %s139
      %s141 = sphi 0, %s139
      %s142 = sphi 0, %s141
      %s156 = sphi 0, %s142
      %s160 = sphi 0, %s160
      %s162 = sphi 0, %s160
      %s163 = sphi 0, %s162
      %s177 = sphi 0, %s163
      %s185 = sphi 0, %s187
      %s188 = sphi 0, %s185
      %s189 = sphi 0, %s188
      %s205 = sphi 0, %s189
    $region4: #{tpu_custom_call.1} parent=1 // loop_header_branch
      %24 = sbr.rel (%p22) target = $region8
    $region5: #{tpu_custom_call.1} parent=1 // loop_body
      %s26 = ssub.s32 %s21, 1
      %s27 = ssub.s32 %s21, 2
      %s34 = sadd.s32 1, %s29
      %p35 = scmp.ge.s32.totalorder %s34, 3
      %s36 = scalar_select %p35, 0, %s34
      %s37 = sadd.s32 1, %s28
      %s38 = scalar_select %p35, %s37, %s28
      %p39 = scmp.ge.s32.totalorder %s38, 2
      %s40 = scalar_select %p39, 0, %s38
      %s42 = sadd.s32 %s41, 1
      %p45 = scmp.eq.s32.totalorder %s21, 5
      %p46 = scmp.ne.s32.totalorder %s41, %s43
      %p47 = scmp.eq.s32.totalorder %s21, 0
      %p48 = por %p46, %p47
      %p49 = scmp.ne.s32.totalorder %s41, %s43
      %p50 = scmp.eq.s32.totalorder %s26, 5
      %p51 = por %p49, %p50
      %p52 = scmp.ne.s32.totalorder %s43, %s44
      %p53 = scmp.eq.s32.totalorder %s26, 0
      %p54 = por %p52, %p53
      %p55 = scmp.ne.s32.totalorder %s43, %s44
      %p56 = scmp.eq.s32.totalorder %s27, 5
      %p57 = por %p55, %p56
      %p59 = scmp.ne.s32.totalorder %s44, %s58
      %p60 = scmp.eq.s32.totalorder %s27, 0
      %p61 = por %p59, %p60
      %s63 = sadd.s32 %s62, 1
      %p66 = scmp.eq.s32.totalorder %s21, 5
      %p67 = scmp.ne.s32.totalorder %s62, %s64
      %p68 = scmp.eq.s32.totalorder %s21, 0
      %p69 = por %p67, %p68
      %p70 = scmp.ne.s32.totalorder %s62, %s64
      %p71 = scmp.eq.s32.totalorder %s26, 5
      %p72 = por %p70, %p71
      %p73 = scmp.ne.s32.totalorder %s64, %s65
      %p74 = scmp.eq.s32.totalorder %s26, 0
      %p75 = por %p73, %p74
      %p76 = scmp.ne.s32.totalorder %s64, %s65
      %p77 = scmp.eq.s32.totalorder %s27, 5
      %p78 = por %p76, %p77
      %p80 = scmp.ne.s32.totalorder %s65, %s79
      %p81 = scmp.eq.s32.totalorder %s27, 0
      %p82 = por %p80, %p81
      %s83 = ssub.s32 %s28, %s40
      %s84 = ssub.s32 %s29, %s36
      %s85 = sor.u32 %s83, %s84
      %p86 = scmp.eq.s32.totalorder %s85, 0
      %s88 = sadd.s32 %s87, 1
      %s89 = scalar_select %p86, %s87, %s88
      %p92 = pneg %p86
      %p93 = scmp.eq.s32.totalorder %s21, 5
      %p94 = por %p92, %p93
      %p95 = scmp.ne.s32.totalorder %s87, %s90
      %p96 = scmp.eq.s32.totalorder %s21, 0
      %p97 = por %p95, %p96
      %p98 = scmp.ne.s32.totalorder %s87, %s90
      %p99 = scmp.eq.s32.totalorder %s26, 5
      %p100 = por %p98, %p99
      %p101 = scmp.ne.s32.totalorder %s90, %s91
      %p102 = scmp.eq.s32.totalorder %s26, 0
      %p103 = por %p101, %p102
      %p104 = scmp.ne.s32.totalorder %s90, %s91
      %p105 = scmp.eq.s32.totalorder %s27, 5
      %p106 = por %p104, %p105
      %p108 = scmp.ne.s32.totalorder %s91, %s107
      %p109 = scmp.eq.s32.totalorder %s27, 0
      %p110 = por %p108, %p109
      %s111 = ssub.s32 %s28, %s40
      %s112 = ssub.s32 %s29, %s36
      %s113 = sor.u32 %s111, %s112
      %p114 = scmp.eq.s32.totalorder %s113, 0
      %s116 = sadd.s32 %s115, 1
      %s117 = scalar_select %p114, %s115, %s116
      %p120 = pneg %p114
      %p121 = scmp.eq.s32.totalorder %s21, 5
      %p122 = por %p120, %p121
      %p123 = scmp.ne.s32.totalorder %s115, %s118
      %p124 = scmp.eq.s32.totalorder %s21, 0
      %p125 = por %p123, %p124
      %p126 = scmp.ne.s32.totalorder %s115, %s118
      %p127 = scmp.eq.s32.totalorder %s26, 5
      %p128 = por %p126, %p127
      %p129 = scmp.ne.s32.totalorder %s118, %s119
      %p130 = scmp.eq.s32.totalorder %s26, 0
      %p131 = por %p129, %p130
      %p132 = scmp.ne.s32.totalorder %s118, %s119
      %p133 = scmp.eq.s32.totalorder %s27, 5
      %p134 = por %p132, %p133
      %p136 = scmp.ne.s32.totalorder %s119, %s135
      %p137 = scmp.eq.s32.totalorder %s27, 0
      %p138 = por %p136, %p137
      %s140 = sadd.s32 %s139, 1
      %p143 = scmp.eq.s32.totalorder %s21, 5
      %p144 = scmp.ne.s32.totalorder %s139, %s141
      %p145 = scmp.eq.s32.totalorder %s21, 0
      %p146 = por %p144, %p145
      %p147 = scmp.ne.s32.totalorder %s139, %s141
      %p148 = scmp.eq.s32.totalorder %s26, 5
      %p149 = por %p147, %p148
      %p150 = scmp.ne.s32.totalorder %s141, %s142
      %p151 = scmp.eq.s32.totalorder %s26, 0
      %p152 = por %p150, %p151
      %p153 = scmp.ne.s32.totalorder %s141, %s142
      %p154 = scmp.eq.s32.totalorder %s27, 5
      %p155 = por %p153, %p154
      %p157 = scmp.ne.s32.totalorder %s142, %s156
      %p158 = scmp.eq.s32.totalorder %s27, 0
      %p159 = por %p157, %p158
      %s161 = sadd.s32 %s160, 1
      %p164 = scmp.eq.s32.totalorder %s21, 5
      %p165 = scmp.ne.s32.totalorder %s160, %s162
      %p166 = scmp.eq.s32.totalorder %s21, 0
      %p167 = por %p165, %p166
      %p168 = scmp.ne.s32.totalorder %s160, %s162
      %p169 = scmp.eq.s32.totalorder %s26, 5
      %p170 = por %p168, %p169
      %p171 = scmp.ne.s32.totalorder %s162, %s163
      %p172 = scmp.eq.s32.totalorder %s26, 0
      %p173 = por %p171, %p172
      %p174 = scmp.ne.s32.totalorder %s162, %s163
      %p175 = scmp.eq.s32.totalorder %s27, 5
      %p176 = por %p174, %p175
      %p178 = scmp.ne.s32.totalorder %s163, %s177
      %p179 = scmp.eq.s32.totalorder %s27, 0
      %p180 = por %p178, %p179
      %s181 = ssub.s32 %s28, %s40
      %s182 = ssub.s32 %s29, %s36
      %s183 = sor.u32 %s181, %s182
      %p184 = scmp.eq.s32.totalorder %s183, 0
      %s186 = sadd.s32 %s185, 1
      %s187 = scalar_select %p184, %s185, %s186
      %p190 = pneg %p184
      %p191 = scmp.eq.s32.totalorder %s21, 5
      %p192 = por %p190, %p191
      %p193 = scmp.ne.s32.totalorder %s185, %s188
      %p194 = scmp.eq.s32.totalorder %s21, 0
      %p195 = por %p193, %p194
      %p196 = scmp.ne.s32.totalorder %s185, %s188
      %p197 = scmp.eq.s32.totalorder %s26, 5
      %p198 = por %p196, %p197
      %p199 = scmp.ne.s32.totalorder %s188, %s189
      %p200 = scmp.eq.s32.totalorder %s26, 0
      %p201 = por %p199, %p200
      %p202 = scmp.ne.s32.totalorder %s188, %s189
      %p203 = scmp.eq.s32.totalorder %s27, 5
      %p204 = por %p202, %p203
      %p206 = scmp.ne.s32.totalorder %s189, %s205
      %p207 = scmp.eq.s32.totalorder %s27, 0
      %p208 = por %p206, %p207
      %p209 = scmp.le.s32.totalorder 1, %s21
      %p210 = scmp.lt.s32.totalorder %s21, 7
      %p211 = pnand %p209, %p210
      %p212 = pneg %p211
      // Predicated region
      $region9: #{tpu_custom_call.1} parent=5 // pred_check
        _
      $region10: #{tpu_custom_call.1} parent=5 // pred_check_branch
        %214 = sbr.rel (%p211) target = $region12
      $region11: #{tpu_custom_call.1} parent=5 // pred_region
        %s215 = ssub.s32 %s21, 1
        // Predicated region
        $region13: #{tpu_custom_call.1} parent=11 // pred_check
          %p216 = pneg %p54
        $region14: #{tpu_custom_call.1} parent=11 // pred_check_branch
          %218 = sbr.rel (%p216) target = $region16
        $region15: #{tpu_custom_call.1} parent=11 // pred_region
          %s220 = ssub.s32 16, 16
          %221 = vsyncadd [#allocation6], %s220
          %s223 = sshll.u32 %s0, 4
          %s224 = int_to_ptr.vmem [resolvable:$true] %s223
          %226 = dma.vmem_to_smem %s224, 16, [#allocation3], [#allocation6]
        $region16: #{tpu_custom_call.1} parent=11 // pred_fallthru
          _
        // Predicated region
        $region17: #{tpu_custom_call.1} parent=11 // pred_check
          %p227 = pneg %p75
        $region18: #{tpu_custom_call.1} parent=11 // pred_check_branch
          %229 = sbr.rel (%p227) target = $region20
        $region19: #{tpu_custom_call.1} parent=11 // pred_region
          %s231 = ssub.s32 16, 16
          %232 = vsyncadd [#allocation8], %s231
          %s234 = sshll.u32 %s1, 4
          %s235 = int_to_ptr.vmem [resolvable:$true] %s234
          %237 = dma.vmem_to_smem %s235, 16, [#allocation7], [#allocation8]
        $region20: #{tpu_custom_call.1} parent=11 // pred_fallthru
          _
        // Predicated region
        $region21: #{tpu_custom_call.1} parent=11 // pred_check
          %p238 = pneg %p152
        $region22: #{tpu_custom_call.1} parent=11 // pred_check_branch
          %240 = sbr.rel (%p238) target = $region24
        $region23: #{tpu_custom_call.1} parent=11 // pred_region
          %s242 = ssub.s32 128, 128
          %243 = vsyncadd [#allocation11], %s242
          %s245 = sshll.u32 [#allocation10], 4
          %s246 = int_to_ptr.vmem [resolvable:$true] %s245
          %248 = dma.hbm_to_vmem [thread:$0]  %s4, 128, %s246, [#allocation11]
        $region24: #{tpu_custom_call.1} parent=11 // pred_fallthru
          _
        // Predicated region
        $region25: #{tpu_custom_call.1} parent=11 // pred_check
          %p249 = pneg %p173
        $region26: #{tpu_custom_call.1} parent=11 // pred_check_branch
          %251 = sbr.rel (%p249) target = $region28
        $region27: #{tpu_custom_call.1} parent=11 // pred_region
          _
        $region28: #{tpu_custom_call.1} parent=11 // pred_fallthru
          _
      $region12: #{tpu_custom_call.1} parent=5 // pred_fallthru
        _
      %p252 = scmp.lt.s32.totalorder %s21, 6
      // Predicated region
      $region29: #{tpu_custom_call.1} parent=5 // pred_check
        %p253 = pneg %p252
      $region30: #{tpu_custom_call.1} parent=5 // pred_check_branch
        %255 = sbr.rel (%p253) target = $region32
      $region31: #{tpu_custom_call.1} parent=5 // pred_region
        // Predicated region
        $region33: #{tpu_custom_call.1} parent=31 // pred_check
          %p256 = pneg %p97
        $region34: #{tpu_custom_call.1} parent=31 // pred_check_branch
          %258 = sbr.rel (%p256) target = $region36
        $region35: #{tpu_custom_call.1} parent=31 // pred_region
          %s259 = sand.u32 %s87, 1
          %s260 = scalar_lea.sflag [#allocation4], %s259
          %s261 = sand.u32 %s87, 1
          %s262 = smul.addr %s261, 8
          %s263 = scalar_lea.vmem [#allocation9], %s262
          %s265 = ssub.s32 128, 128
          %266 = vsyncadd %s260, %s265
          %s267 = smul.addr %s29, 2
          %s268 = smul.addr %s28, 6
          %s269 = sadd.s32 %s267, %s268
          %s270 = smul.addr %s269, 64
          %s271 = scalar_lea.hbm %s2, %s270
          %s273 = sshll.u32 %s263, 4
          %s274 = int_to_ptr.vmem [resolvable:$true] %s273
          %276 = dma.hbm_to_vmem [thread:$0]  %s271, 128, %s274, %s260
        $region36: #{tpu_custom_call.1} parent=31 // pred_fallthru
          _
        // Predicated region
        $region37: #{tpu_custom_call.1} parent=31 // pred_check
          %p277 = pneg %p125
        $region38: #{tpu_custom_call.1} parent=31 // pred_check_branch
          %279 = sbr.rel (%p277) target = $region40
        $region39: #{tpu_custom_call.1} parent=31 // pred_region
          %p280 = scmp.lt.s32.totalorder %s28, 1
          %s281 = scalar_select %p280, %s28, 1
          %p282 = scmp.lt.s32.totalorder %s29, 2
          %s283 = scalar_select %p282, %s29, 2
          %s284 = smul.addr %s283, 2
          %s285 = smul.addr %s281, 6
          %s286 = sadd.s32 %s284, %s285
          %s287 = scalar_lea.vmem %s3, %s286
        $region40: #{tpu_custom_call.1} parent=31 // pred_fallthru
          _
      $region32: #{tpu_custom_call.1} parent=5 // pred_fallthru
        _
      %p288 = scmp.le.s32.totalorder 1, %s21
      %p289 = scmp.lt.s32.totalorder %s21, 7
      %p290 = pnand %p288, %p289
      %p291 = pneg %p290
      // Predicated region
      $region41: #{tpu_custom_call.1} parent=5 // pred_check
        _
      $region42: #{tpu_custom_call.1} parent=5 // pred_check_branch
        %293 = sbr.rel (%p290) target = $region44
      $region43: #{tpu_custom_call.1} parent=5 // pred_region
        %s294 = ssub.s32 %s21, 1
        // Predicated region
        $region45: #{tpu_custom_call.1} parent=43 // pred_check
          %p295 = pneg %p54
        $region46: #{tpu_custom_call.1} parent=43 // pred_check_branch
          %297 = sbr.rel (%p295) target = $region48
        $region47: #{tpu_custom_call.1} parent=43 // pred_region
          %298 = dma.done [#allocation6], 16
        $region48: #{tpu_custom_call.1} parent=43 // pred_fallthru
          _
        // Predicated region
        $region49: #{tpu_custom_call.1} parent=43 // pred_check
          %p299 = pneg %p75
        $region50: #{tpu_custom_call.1} parent=43 // pred_check_branch
          %301 = sbr.rel (%p299) target = $region52
        $region51: #{tpu_custom_call.1} parent=43 // pred_region
          %302 = dma.done [#allocation8], 16
        $region52: #{tpu_custom_call.1} parent=43 // pred_fallthru
          _
        %s303 = sand.u32 %s90, 1
        %s304 = scalar_lea.sflag [#allocation4], %s303
        %s305 = sand.u32 %s90, 1
        %s306 = smul.addr %s305, 8
        %s307 = scalar_lea.vmem [#allocation9], %s306
        // Predicated region
        $region53: #{tpu_custom_call.1} parent=43 // pred_check
          %p308 = pneg %p103
        $region54: #{tpu_custom_call.1} parent=43 // pred_check_branch
          %310 = sbr.rel (%p308) target = $region56
        $region55: #{tpu_custom_call.1} parent=43 // pred_region
          %311 = dma.done %s304, 128
        $region56: #{tpu_custom_call.1} parent=43 // pred_fallthru
          _
        // Predicated region
        $region57: #{tpu_custom_call.1} parent=43 // pred_check
          %p312 = pneg %p152
        $region58: #{tpu_custom_call.1} parent=43 // pred_check_branch
          %314 = sbr.rel (%p312) target = $region60
        $region59: #{tpu_custom_call.1} parent=43 // pred_region
          %315 = dma.done [#allocation11], 128
        $region60: #{tpu_custom_call.1} parent=43 // pred_fallthru
          _
        %316 = sfence
        %p317 = pneg %p54
        %p318 = pneg %p51
        %p319 = pneg %p75
        %p320 = pneg %p72
        %s321 = sand.u32 %s90, 1
        %s322 = scalar_lea.sflag [#allocation4], %s321
        %s323 = sand.u32 %s90, 1
        %s324 = smul.addr %s323, 8
        %s325 = scalar_lea.vmem [#allocation9], %s324
        %p326 = pneg %p103
        %p327 = pneg %p100
        %p328 = scmp.lt.s32.totalorder %s30, 1
        %s329 = scalar_select %p328, %s30, 1
        %p330 = scmp.lt.s32.totalorder %s31, 2
        %s331 = scalar_select %p330, %s31, 2
        %s332 = smul.addr %s331, 2
        %s333 = smul.addr %s329, 6
        %s334 = sadd.s32 %s332, %s333
        %s335 = scalar_lea.vmem %s3, %s334
        %p336 = pneg %p131
        %p337 = pneg %p128
        %p338 = pneg %p152
        %p339 = pneg %p149
        %p340 = pneg %p173
        %p341 = pneg %p170
        %p342 = pneg %p201
        %p343 = pneg %p198
        %s344 = sand.u32 %s188, 1
        %s345 = scalar_lea.sflag [#allocation5], %s344
        %s346 = sand.u32 %s188, 1
        %s347 = smul.addr %s346, 8
        %s348 = scalar_lea.vmem [#allocation12], %s347
        %p349 = scmp.lt.s32.totalorder %s30, 1
        %s350 = scalar_select %p349, %s30, 1
        %p351 = scmp.lt.s32.totalorder %s31, 2
        %s352 = scalar_select %p351, %s31, 2
        %s353 = smul.addr %s352, 2
        %s354 = smul.addr %s350, 6
        %s355 = sadd.s32 %s353, %s354
        %s356 = scalar_lea.vmem %s3, %s355
        %s357 = sld [smem:[#allocation3 + %s30]]
        %s358 = sld [smem:[#allocation7 + %s30]]
        %vm359 = vcmask 1027072
        %360 = vst.msk [vmem:[#allocation2 + $0x24] sm:$0xf] %vm359, 0.0
        %361 = vst.msk [vmem:[#allocation2 + $0x4c] sm:$0xf] %vm359, 0.0
        %362 = vst.msk [vmem:[#allocation2 + $0x74] sm:$0xf] %vm359, 0.0
        %v363 = vld [vmem:[%s356] sm:$0x3]
        %vm364 = vcmp.ne.f32.partialorder %v363, 0.0
        %v365 = vsel %vm364, %v363, 0.0
        %v366 = vmax.f32 %v365, 0.01
        %v367 = vmin.f32 %v366, 256.0
        %v368 = vstv %s357
        %v369 = vrcp.pop %v367
        %v370 = vmul.f32 %v368, %v369
        %v371 = vmul.f32 %v370, 16.0
        %v372 = vstv %s358
        %v373 = vrcp.pop %v372
        %v374 = vmul.f32 %v371, %v373
        %v375 = vmul.f32 %v374, 0.5
        %v376 = vadd.f32 %v370, %v374
        %v377 = vsub.f32 %v370, %v374
        %v378 = vld [vmem:[%s356] sm:$0x1]
        %vm379 = vcmp.ne.f32.partialorder %v378, 0.0
        %v380 = vsel %vm364, 1, 0
        %381 = vrot.lane.b32.xlu0 %v380, 109
        %v382 = vpop.permute.xlu0 %381
        %v383 = vrot.slane %v382, 1
        %vm384 = vcmask 891904
        %v385 = vsel %vm384, %v382, %v383
        %vm386 = vcmp.ne.s32.totalorder %v385, 0
        %vm387 = vmand %vm379, %vm386
        %v388 = vsel %vm387, %v378, 0.0
        %v389 = vmax.f32 %v388, 0.01
        %v390 = vmin.f32 %v389, 256.0
        %v391 = vrcp.pop %v390
        %v392 = vmul.f32 %v368, %v391
        %394 = vrot.lane.b32.xlu0 %v376, 109
        %v395 = vpop.permute.xlu0 %394
        %v396 = vrot.slane %v395, 1
        %v397 = vsel %vm384, %v395, %v396
        %v399 = vsub.f32 %v392, %v397
        %v400 = vand.u32 2147483647, %v399
        %402 = vrot.lane.b32.xlu0 %v375, 109
        %v403 = vpop.permute.xlu0 %402
        %v404 = vrot.slane %v403, 1
        %v405 = vsel %vm384, %v403, %v404
        %vm407 = vcmp.le.f32.partialorder %v400, %v405
        %409 = vrot.lane.b32.xlu0 %v370, 109
        %v410 = vpop.permute.xlu0 %409
        %v411 = vrot.slane %v410, 1
        %v412 = vsel %vm384, %v410, %v411
        %v414 = vsub.f32 %v392, %v412
        %v415 = vand.u32 2147483647, %v414
        %vm416 = vcmp.le.f32.partialorder %v415, %v405
        %vm417 = vmxor %vm387, 1
        %vm418 = vmor %vm416, %vm417
        %420 = vrot.lane.b32.xlu0 %v377, 109
        %v421 = vpop.permute.xlu0 %420
        %v422 = vrot.slane %v421, 1
        %v423 = vsel %vm384, %v421, %v422
        %v425 = vsub.f32 %v392, %v423
        %v426 = vand.u32 2147483647, %v425
        %vm427 = vcmp.le.f32.partialorder %v426, %v405
        %v428 = vld [vmem:[%s307] sm:$0xf]
        %v429 = vsel %vm407, 1, 0
        %v430 = vlaneseq
        %v431 = vshrl.u32 %v430, 7
        %v432 = vsub.s32 0, %v431
        %v433 = vrot.slane %v429, %v432
        %vm434 = vcmp.eq.s32.totalorder %v433, 1
        %v435 = vsel %vm434, %v428, 0.0
        %436 = vst.msk [vmem:[#allocation2] sm:$0xf] %vm359, %v435
        %v437 = vsel %vm418, 1, 0
        %v438 = vlaneseq
        %v439 = vshrl.u32 %v438, 7
        %v440 = vsub.s32 0, %v439
        %v441 = vrot.slane %v437, %v440
        %vm442 = vcmp.eq.s32.totalorder %v441, 1
        %v443 = vsel %vm442, %v428, 0.0
        %444 = vst.msk [vmem:[#allocation2 + $0x28] sm:$0xf] %vm359, %v443
        %v445 = vsel %vm427, 1, 0
        %v446 = vlaneseq
        %v447 = vshrl.u32 %v446, 7
        %v448 = vsub.s32 0, %v447
        %v449 = vrot.slane %v445, %v448
        %vm450 = vcmp.eq.s32.totalorder %v449, 1
        %v451 = vsel %vm450, %v428, 0.0
        %452 = vst.msk [vmem:[#allocation2 + $0x50] sm:$0xf] %vm359, %v451
        %v453 = vld [vmem:[%s356] sm:$0x1]
        %vm454 = vcmp.ne.f32.partialorder %v453, 0.0
        %455 = vrot.lane.b32.xlu0 %v380, 110
        %v456 = vpop.permute.xlu0 %455
        %v457 = vrot.slane %v456, 1
        %vm458 = vcmask 900096
        %v459 = vsel %vm458, %v456, %v457
        %vm460 = vcmp.ne.s32.totalorder %v459, 0
        %vm461 = vmand %vm454, %vm460
        %v462 = vsel %vm461, %v453, 0.0
        %v463 = vmax.f32 %v462, 0.01
        %v464 = vmin.f32 %v463, 256.0
        %v465 = vrcp.pop %v464
        %v466 = vmul.f32 %v368, %v465
        %467 = vrot.lane.b32.xlu0 %v376, 110
        %v468 = vpop.permute.xlu0 %467
        %v469 = vrot.slane %v468, 1
        %v470 = vsel %vm458, %v468, %v469
        %v472 = vsub.f32 %v466, %v470
        %v473 = vand.u32 2147483647, %v472
        %474 = vrot.lane.b32.xlu0 %v375, 110
        %v475 = vpop.permute.xlu0 %474
        %v476 = vrot.slane %v475, 1
        %v477 = vsel %vm458, %v475, %v476
        %vm479 = vcmp.le.f32.partialorder %v473, %v477
        %480 = vrot.lane.b32.xlu0 %v370, 110
        %v481 = vpop.permute.xlu0 %480
        %v482 = vrot.slane %v481, 1
        %v483 = vsel %vm458, %v481, %v482
        %v485 = vsub.f32 %v466, %v483
        %v486 = vand.u32 2147483647, %v485
        %vm487 = vcmp.le.f32.partialorder %v486, %v477
        %vm488 = vmxor %vm461, 1
        %vm489 = vmor %vm487, %vm488
        %490 = vrot.lane.b32.xlu0 %v377, 110
        %v491 = vpop.permute.xlu0 %490
        %v492 = vrot.slane %v491, 1
        %v493 = vsel %vm458, %v491, %v492
        %v495 = vsub.f32 %v466, %v493
        %v496 = vand.u32 2147483647, %v495
        %vm497 = vcmp.le.f32.partialorder %v496, %v477
        %v498 = vld [vmem:[%s307] sm:$0xf]
        %v499 = vsel %vm479, 1, 0
        %v500 = vlaneseq
        %v501 = vshrl.u32 %v500, 7
        %v502 = vsub.s32 0, %v501
        %v503 = vrot.slane %v499, %v502
        %vm504 = vcmp.eq.s32.totalorder %v503, 1
        %v505 = vsel %vm504, %v498, 0.0
        %507 = vrot.lane.b32.xlu0 %v505, 127
        %v508 = vpop.permute.xlu0 %507
        %510 = vst.msk [vmem:[#allocation2 + $0x4] sm:$0xf] %vm359, %v508
        %v511 = vsel %vm489, 1, 0
        %v512 = vlaneseq
        %v513 = vshrl.u32 %v512, 7
        %v514 = vsub.s32 0, %v513
        %v515 = vrot.slane %v511, %v514
        %vm516 = vcmp.eq.s32.totalorder %v515, 1
        %v517 = vsel %vm516, %v498, 0.0
        %519 = vrot.lane.b32.xlu0 %v517, 127
        %v520 = vpop.permute.xlu0 %519
        %522 = vst.msk [vmem:[#allocation2 + $0x2c] sm:$0xf] %vm359, %v520
        %v523 = vsel %vm497, 1, 0
        %v524 = vlaneseq
        %v525 = vshrl.u32 %v524, 7
        %v526 = vsub.s32 0, %v525
        %v527 = vrot.slane %v523, %v526
        %vm528 = vcmp.eq.s32.totalorder %v527, 1
        %v529 = vsel %vm528, %v498, 0.0
        %531 = vrot.lane.b32.xlu0 %v529, 127
        %v532 = vpop.permute.xlu0 %531
        %534 = vst.msk [vmem:[#allocation2 + $0x54] sm:$0xf] %vm359, %v532
        %v535 = vld [vmem:[%s356] sm:$0x1]
        %vm536 = vcmp.ne.f32.partialorder %v535, 0.0
        %537 = vrot.lane.b32.xlu0 %v380, 111
        %v538 = vpop.permute.xlu0 %537
        %v539 = vrot.slane %v538, 1
        %vm540 = vcmask 908288
        %v541 = vsel %vm540, %v538, %v539
        %vm542 = vcmp.ne.s32.totalorder %v541, 0
        %vm543 = vmand %vm536, %vm542
        %v544 = vsel %vm543, %v535, 0.0
        %v545 = vmax.f32 %v544, 0.01
        %v546 = vmin.f32 %v545, 256.0
        %v547 = vrcp.pop %v546
        %v548 = vmul.f32 %v368, %v547
        %549 = vrot.lane.b32.xlu0 %v376, 111
        %v550 = vpop.permute.xlu0 %549
        %v551 = vrot.slane %v550, 1
        %v552 = vsel %vm540, %v550, %v551
        %v554 = vsub.f32 %v548, %v552
        %v555 = vand.u32 2147483647, %v554
        %556 = vrot.lane.b32.xlu0 %v375, 111
        %v557 = vpop.permute.xlu0 %556
        %v558 = vrot.slane %v557, 1
        %v559 = vsel %vm540, %v557, %v558
        %vm561 = vcmp.le.f32.partialorder %v555, %v559
        %562 = vrot.lane.b32.xlu0 %v370, 111
        %v563 = vpop.permute.xlu0 %562
        %v564 = vrot.slane %v563, 1
        %v565 = vsel %vm540, %v563, %v564
        %v567 = vsub.f32 %v548, %v565
        %v568 = vand.u32 2147483647, %v567
        %vm569 = vcmp.le.f32.partialorder %v568, %v559
        %vm570 = vmxor %vm543, 1
        %vm571 = vmor %vm569, %vm570
        %572 = vrot.lane.b32.xlu0 %v377, 111
        %v573 = vpop.permute.xlu0 %572
        %v574 = vrot.slane %v573, 1
        %v575 = vsel %vm540, %v573, %v574
        %v577 = vsub.f32 %v548, %v575
        %v578 = vand.u32 2147483647, %v577
        %vm579 = vcmp.le.f32.partialorder %v578, %v559
        %v580 = vld [vmem:[%s307] sm:$0xf]
        %v581 = vsel %vm561, 1, 0
        %v582 = vlaneseq
        %v583 = vshrl.u32 %v582, 7
        %v584 = vsub.s32 0, %v583
        %v585 = vrot.slane %v581, %v584
        %vm586 = vcmp.eq.s32.totalorder %v585, 1
        %v587 = vsel %vm586, %v580, 0.0
        %589 = vrot.lane.b32.xlu0 %v587, 126
        %v590 = vpop.permute.xlu0 %589
        %592 = vst.msk [vmem:[#allocation2 + $0x8] sm:$0xf] %vm359, %v590
        %v593 = vsel %vm571, 1, 0
        %v594 = vlaneseq
        %v595 = vshrl.u32 %v594, 7
        %v596 = vsub.s32 0, %v595
        %v597 = vrot.slane %v593, %v596
        %vm598 = vcmp.eq.s32.totalorder %v597, 1
        %v599 = vsel %vm598, %v580, 0.0
        %601 = vrot.lane.b32.xlu0 %v599, 126
        %v602 = vpop.permute.xlu0 %601
        %604 = vst.msk [vmem:[#allocation2 + $0x30] sm:$0xf] %vm359, %v602
        %v605 = vsel %vm579, 1, 0
        %v606 = vlaneseq
        %v607 = vshrl.u32 %v606, 7
        %v608 = vsub.s32 0, %v607
        %v609 = vrot.slane %v605, %v608
        %vm610 = vcmp.eq.s32.totalorder %v609, 1
        %v611 = vsel %vm610, %v580, 0.0
        %613 = vrot.lane.b32.xlu0 %v611, 126
        %v614 = vpop.permute.xlu0 %613
        %616 = vst.msk [vmem:[#allocation2 + $0x58] sm:$0xf] %vm359, %v614
        %v617 = vld [vmem:[%s356] sm:$0x3]
        %vm618 = vcmp.ne.f32.partialorder %v617, 0.0
        %619 = vrot.lane.b32.xlu0 %v380, 127
        %v620 = vpop.permute.xlu0 %619
        %v621 = vrot.slane %v620, 1
        %vm622 = vcmask 1039360
        %v623 = vsel %vm622, %v620, %v621
        %vm624 = vcmp.ne.s32.totalorder %v623, 0
        %vm625 = vmand %vm618, %vm624
        %v626 = vsel %vm625, %v617, 0.0
        %v627 = vmax.f32 %v626, 0.01
        %v628 = vmin.f32 %v627, 256.0
        %v629 = vrcp.pop %v628
        %v630 = vmul.f32 %v368, %v629
        %631 = vrot.lane.b32.xlu0 %v376, 127
        %v632 = vpop.permute.xlu0 %631
        %v633 = vrot.slane %v632, 1
        %v634 = vsel %vm622, %v632, %v633
        %v636 = vsub.f32 %v630, %v634
        %v637 = vand.u32 2147483647, %v636
        %638 = vrot.lane.b32.xlu0 %v375, 127
        %v639 = vpop.permute.xlu0 %638
        %v640 = vrot.slane %v639, 1
        %v641 = vsel %vm622, %v639, %v640
        %vm643 = vcmp.le.f32.partialorder %v637, %v641
        %644 = vrot.lane.b32.xlu0 %v370, 127
        %v645 = vpop.permute.xlu0 %644
        %v646 = vrot.slane %v645, 1
        %v647 = vsel %vm622, %v645, %v646
        %v649 = vsub.f32 %v630, %v647
        %v650 = vand.u32 2147483647, %v649
        %vm651 = vcmp.le.f32.partialorder %v650, %v641
        %vm652 = vmxor %vm625, 1
        %vm653 = vmor %vm651, %vm652
        %654 = vrot.lane.b32.xlu0 %v377, 127
        %v655 = vpop.permute.xlu0 %654
        %v656 = vrot.slane %v655, 1
        %v657 = vsel %vm622, %v655, %v656
        %v659 = vsub.f32 %v630, %v657
        %v660 = vand.u32 2147483647, %v659
        %vm661 = vcmp.le.f32.partialorder %v660, %v641
        %v662 = vld [vmem:[%s307] sm:$0xff]
        %v663 = vsel %vm643, 1, 0
        %v664 = vlaneseq
        %v665 = vshrl.u32 %v664, 7
        %v666 = vsub.s32 0, %v665
        %v667 = vrot.slane %v663, %v666
        %v668 = vlaneseq
        %v669 = vshrl.u32 %v668, 7
        %v670 = vsub.s32 1, %v669
        %v671 = vrot.slane %v663, %v670
        %vm672 = vcmp.eq.s32.totalorder %v667, 1
        %vm673 = vcmp.eq.s32.totalorder %v671, 1
        %v675 = vcombine.high %v662, %v662
        %v677 = vsel %vm672, %v662, 0.0
        %v678 = vsel %vm673, %v675, 0.0
        %681 = vrot.lane.b32.xlu0 %v677, 110
        %v682 = vpop.permute.xlu0 %681
        %683 = vrot.lane.b32.xlu0 %v678, 110
        %v684 = vpop.permute.xlu0 %683
        %v685 = vsel %vm458, %v682, %v684
        %687 = vst.msk [vmem:[#allocation2 + $0xc] sm:$0xf] %vm359, %v685
        %v688 = vsel %vm653, 1, 0
        %v689 = vlaneseq
        %v690 = vshrl.u32 %v689, 7
        %v691 = vsub.s32 0, %v690
        %v692 = vrot.slane %v688, %v691
        %v693 = vlaneseq
        %v694 = vshrl.u32 %v693, 7
        %v695 = vsub.s32 1, %v694
        %v696 = vrot.slane %v688, %v695
        %vm697 = vcmp.eq.s32.totalorder %v692, 1
        %vm698 = vcmp.eq.s32.totalorder %v696, 1
        %v699 = vsel %vm697, %v662, 0.0
        %v700 = vsel %vm698, %v675, 0.0
        %703 = vrot.lane.b32.xlu0 %v699, 110
        %v704 = vpop.permute.xlu0 %703
        %705 = vrot.lane.b32.xlu0 %v700, 110
        %v706 = vpop.permute.xlu0 %705
        %v707 = vsel %vm458, %v704, %v706
        %709 = vst.msk [vmem:[#allocation2 + $0x34] sm:$0xf] %vm359, %v707
        %v710 = vsel %vm661, 1, 0
        %v711 = vlaneseq
        %v712 = vshrl.u32 %v711, 7
        %v713 = vsub.s32 0, %v712
        %v714 = vrot.slane %v710, %v713
        %v715 = vlaneseq
        %v716 = vshrl.u32 %v715, 7
        %v717 = vsub.s32 1, %v716
        %v718 = vrot.slane %v710, %v717
        %vm719 = vcmp.eq.s32.totalorder %v714, 1
        %vm720 = vcmp.eq.s32.totalorder %v718, 1
        %v721 = vsel %vm719, %v662, 0.0
        %v722 = vsel %vm720, %v675, 0.0
        %725 = vrot.lane.b32.xlu0 %v721, 110
        %v726 = vpop.permute.xlu0 %725
        %727 = vrot.lane.b32.xlu0 %v722, 110
        %v728 = vpop.permute.xlu0 %727
        %v729 = vsel %vm458, %v726, %v728
        %731 = vst.msk [vmem:[#allocation2 + $0x5c] sm:$0xf] %vm359, %v729
        %v732 = vld [vmem:[%s356] sm:$0x3]
        %vm733 = vcmp.ne.f32.partialorder %v732, 0.0
        %vm734 = vmand %vm733, %vm364
        %v735 = vsel %vm734, %v732, 0.0
        %v736 = vmax.f32 %v735, 0.01
        %v737 = vmin.f32 %v736, 256.0
        %v738 = vrcp.pop %v737
        %v739 = vmul.f32 %v368, %v738
        %v740 = vsub.f32 %v739, %v376
        %v741 = vand.u32 2147483647, %v740
        %vm742 = vcmp.le.f32.partialorder %v741, %v375
        %v743 = vsub.f32 %v739, %v370
        %v744 = vand.u32 2147483647, %v743
        %vm745 = vcmp.le.f32.partialorder %v744, %v375
        %vm746 = vmxor %vm734, 1
        %vm747 = vmor %vm745, %vm746
        %v748 = vsub.f32 %v739, %v377
        %v749 = vand.u32 2147483647, %v748
        %vm750 = vcmp.le.f32.partialorder %v749, %v375
        %v751 = vld [vmem:[%s307] sm:$0xff]
        %v752 = vsel %vm742, 1, 0
        %v753 = vlaneseq
        %v754 = vshrl.u32 %v753, 7
        %v755 = vsub.s32 0, %v754
        %v756 = vrot.slane %v752, %v755
        %v757 = vlaneseq
        %v758 = vshrl.u32 %v757, 7
        %v759 = vsub.s32 1, %v758
        %v760 = vrot.slane %v752, %v759
        %vm761 = vcmp.eq.s32.totalorder %v756, 1
        %vm762 = vcmp.eq.s32.totalorder %v760, 1
        %v764 = vcombine.high %v751, %v751
        %v766 = vsel %vm761, %v751, 0.0
        %v767 = vsel %vm762, %v764, 0.0
        %770 = vrot.lane.b32.xlu0 %v766, 109
        %v771 = vpop.permute.xlu0 %770
        %772 = vrot.lane.b32.xlu0 %v767, 109
        %v773 = vpop.permute.xlu0 %772
        %v774 = vsel %vm384, %v771, %v773
        %776 = vst.msk [vmem:[#allocation2 + $0x10] sm:$0xf] %vm359, %v774
        %v777 = vsel %vm747, 1, 0
        %v778 = vlaneseq
        %v779 = vshrl.u32 %v778, 7
        %v780 = vsub.s32 0, %v779
        %v781 = vrot.slane %v777, %v780
        %v782 = vlaneseq
        %v783 = vshrl.u32 %v782, 7
        %v784 = vsub.s32 1, %v783
        %v785 = vrot.slane %v777, %v784
        %vm786 = vcmp.eq.s32.totalorder %v781, 1
        %vm787 = vcmp.eq.s32.totalorder %v785, 1
        %v788 = vsel %vm786, %v751, 0.0
        %v789 = vsel %vm787, %v764, 0.0
        %792 = vrot.lane.b32.xlu0 %v788, 109
        %v793 = vpop.permute.xlu0 %792
        %794 = vrot.lane.b32.xlu0 %v789, 109
        %v795 = vpop.permute.xlu0 %794
        %v796 = vsel %vm384, %v793, %v795
        %798 = vst.msk [vmem:[#allocation2 + $0x38] sm:$0xf] %vm359, %v796
        %v799 = vsel %vm750, 1, 0
        %v800 = vlaneseq
        %v801 = vshrl.u32 %v800, 7
        %v802 = vsub.s32 0, %v801
        %v803 = vrot.slane %v799, %v802
        %v804 = vlaneseq
        %v805 = vshrl.u32 %v804, 7
        %v806 = vsub.s32 1, %v805
        %v807 = vrot.slane %v799, %v806
        %vm808 = vcmp.eq.s32.totalorder %v803, 1
        %vm809 = vcmp.eq.s32.totalorder %v807, 1
        %v810 = vsel %vm808, %v751, 0.0
        %v811 = vsel %vm809, %v764, 0.0
        %814 = vrot.lane.b32.xlu0 %v810, 109
        %v815 = vpop.permute.xlu0 %814
        %816 = vrot.lane.b32.xlu0 %v811, 109
        %v817 = vpop.permute.xlu0 %816
        %v818 = vsel %vm384, %v815, %v817
        %820 = vst.msk [vmem:[#allocation2 + $0x60] sm:$0xf] %vm359, %v818
        %v821 = vld [vmem:[%s356] sm:$0x3]
        %vm822 = vcmp.ne.f32.partialorder %v821, 0.0
        %823 = vrot.lane.b32.xlu0 %v380, 1
        %v824 = vpop.permute.xlu0 %823
        %v825 = vrot.slane %v824, 7
        %vm826 = vcmask 7168
        %v827 = vsel %vm826, %v825, %v824
        %vm828 = vcmp.ne.s32.totalorder %v827, 0
        %vm829 = vmand %vm822, %vm828
        %v830 = vsel %vm829, %v821, 0.0
        %v831 = vmax.f32 %v830, 0.01
        %v832 = vmin.f32 %v831, 256.0
        %v833 = vrcp.pop %v832
        %v834 = vmul.f32 %v368, %v833
        %835 = vrot.lane.b32.xlu0 %v376, 1
        %v836 = vpop.permute.xlu0 %835
        %v837 = vrot.slane %v836, 7
        %v838 = vsel %vm826, %v837, %v836
        %v840 = vsub.f32 %v834, %v838
        %v841 = vand.u32 2147483647, %v840
        %842 = vrot.lane.b32.xlu0 %v375, 1
        %v843 = vpop.permute.xlu0 %842
        %v844 = vrot.slane %v843, 7
        %v845 = vsel %vm826, %v844, %v843
        %vm847 = vcmp.le.f32.partialorder %v841, %v845
        %848 = vrot.lane.b32.xlu0 %v370, 1
        %v849 = vpop.permute.xlu0 %848
        %v850 = vrot.slane %v849, 7
        %v851 = vsel %vm826, %v850, %v849
        %v853 = vsub.f32 %v834, %v851
        %v854 = vand.u32 2147483647, %v853
        %vm855 = vcmp.le.f32.partialorder %v854, %v845
        %vm856 = vmxor %vm829, 1
        %vm857 = vmor %vm855, %vm856
        %858 = vrot.lane.b32.xlu0 %v377, 1
        %v859 = vpop.permute.xlu0 %858
        %v860 = vrot.slane %v859, 7
        %v861 = vsel %vm826, %v860, %v859
        %v863 = vsub.f32 %v834, %v861
        %v864 = vand.u32 2147483647, %v863
        %vm865 = vcmp.le.f32.partialorder %v864, %v845
        %v866 = vld [vmem:[%s307] sm:$0xff]
        %v867 = vsel %vm847, 1, 0
        %v868 = vlaneseq
        %v869 = vshrl.u32 %v868, 7
        %v870 = vsub.s32 0, %v869
        %v871 = vrot.slane %v867, %v870
        %v872 = vlaneseq
        %v873 = vshrl.u32 %v872, 7
        %v874 = vsub.s32 1, %v873
        %v875 = vrot.slane %v867, %v874
        %vm876 = vcmp.eq.s32.totalorder %v871, 1
        %vm877 = vcmp.eq.s32.totalorder %v875, 1
        %v879 = vcombine.high %v866, %v866
        %v881 = vsel %vm876, %v866, 0.0
        %v882 = vsel %vm877, %v879, 0.0
        %885 = vrot.lane.b32.xlu0 %v881, 108
        %v886 = vpop.permute.xlu0 %885
        %887 = vrot.lane.b32.xlu0 %v882, 108
        %v888 = vpop.permute.xlu0 %887
        %vm889 = vcmask 883712
        %v890 = vsel %vm889, %v886, %v888
        %892 = vst.msk [vmem:[#allocation2 + $0x14] sm:$0xf] %vm359, %v890
        %v893 = vsel %vm857, 1, 0
        %v894 = vlaneseq
        %v895 = vshrl.u32 %v894, 7
        %v896 = vsub.s32 0, %v895
        %v897 = vrot.slane %v893, %v896
        %v898 = vlaneseq
        %v899 = vshrl.u32 %v898, 7
        %v900 = vsub.s32 1, %v899
        %v901 = vrot.slane %v893, %v900
        %vm902 = vcmp.eq.s32.totalorder %v897, 1
        %vm903 = vcmp.eq.s32.totalorder %v901, 1
        %v904 = vsel %vm902, %v866, 0.0
        %v905 = vsel %vm903, %v879, 0.0
        %908 = vrot.lane.b32.xlu0 %v904, 108
        %v909 = vpop.permute.xlu0 %908
        %910 = vrot.lane.b32.xlu0 %v905, 108
        %v911 = vpop.permute.xlu0 %910
        %v912 = vsel %vm889, %v909, %v911
        %914 = vst.msk [vmem:[#allocation2 + $0x3c] sm:$0xf] %vm359, %v912
        %v915 = vsel %vm865, 1, 0
        %v916 = vlaneseq
        %v917 = vshrl.u32 %v916, 7
        %v918 = vsub.s32 0, %v917
        %v919 = vrot.slane %v915, %v918
        %v920 = vlaneseq
        %v921 = vshrl.u32 %v920, 7
        %v922 = vsub.s32 1, %v921
        %v923 = vrot.slane %v915, %v922
        %vm924 = vcmp.eq.s32.totalorder %v919, 1
        %vm925 = vcmp.eq.s32.totalorder %v923, 1
        %v926 = vsel %vm924, %v866, 0.0
        %v927 = vsel %vm925, %v879, 0.0
        %930 = vrot.lane.b32.xlu0 %v926, 108
        %v931 = vpop.permute.xlu0 %930
        %932 = vrot.lane.b32.xlu0 %v927, 108
        %v933 = vpop.permute.xlu0 %932
        %v934 = vsel %vm889, %v931, %v933
        %936 = vst.msk [vmem:[#allocation2 + $0x64] sm:$0xf] %vm359, %v934
        %v937 = vld [vmem:[%s356] sm:$0x3]
        %vm938 = vcmp.ne.f32.partialorder %v937, 0.0
        %939 = vrot.lane.b32.xlu0 %v380, 17
        %v940 = vpop.permute.xlu0 %939
        %v941 = vrot.slane %v940, 7
        %vm942 = vcmask 138240
        %v943 = vsel %vm942, %v941, %v940
        %vm944 = vcmp.ne.s32.totalorder %v943, 0
        %vm945 = vmand %vm938, %vm944
        %v946 = vsel %vm945, %v937, 0.0
        %v947 = vmax.f32 %v946, 0.01
        %v948 = vmin.f32 %v947, 256.0
        %v949 = vrcp.pop %v948
        %v950 = vmul.f32 %v368, %v949
        %951 = vrot.lane.b32.xlu0 %v376, 17
        %v952 = vpop.permute.xlu0 %951
        %v953 = vrot.slane %v952, 7
        %v954 = vsel %vm942, %v953, %v952
        %v956 = vsub.f32 %v950, %v954
        %v957 = vand.u32 2147483647, %v956
        %958 = vrot.lane.b32.xlu0 %v375, 17
        %v959 = vpop.permute.xlu0 %958
        %v960 = vrot.slane %v959, 7
        %v961 = vsel %vm942, %v960, %v959
        %vm963 = vcmp.le.f32.partialorder %v957, %v961
        %964 = vrot.lane.b32.xlu0 %v370, 17
        %v965 = vpop.permute.xlu0 %964
        %v966 = vrot.slane %v965, 7
        %v967 = vsel %vm942, %v966, %v965
        %v969 = vsub.f32 %v950, %v967
        %v970 = vand.u32 2147483647, %v969
        %vm971 = vcmp.le.f32.partialorder %v970, %v961
        %vm972 = vmxor %vm945, 1
        %vm973 = vmor %vm971, %vm972
        %974 = vrot.lane.b32.xlu0 %v377, 17
        %v975 = vpop.permute.xlu0 %974
        %v976 = vrot.slane %v975, 7
        %v977 = vsel %vm942, %v976, %v975
        %v979 = vsub.f32 %v950, %v977
        %v980 = vand.u32 2147483647, %v979
        %vm981 = vcmp.le.f32.partialorder %v980, %v961
        %v982 = vld [vmem:[%s307] sm:$0xff]
        %v983 = vsel %vm963, 1, 0
        %v984 = vlaneseq
        %v985 = vshrl.u32 %v984, 7
        %v986 = vsub.s32 0, %v985
        %v987 = vrot.slane %v983, %v986
        %v988 = vlaneseq
        %v989 = vshrl.u32 %v988, 7
        %v990 = vsub.s32 1, %v989
        %v991 = vrot.slane %v983, %v990
        %vm992 = vcmp.eq.s32.totalorder %v987, 1
        %vm993 = vcmp.eq.s32.totalorder %v991, 1
        %v995 = vcombine.high %v982, %v982
        %v997 = vsel %vm992, %v982, 0.0
        %v998 = vsel %vm993, %v995, 0.0
        %1001 = vrot.lane.b32.xlu0 %v997, 92
        %v1002 = vpop.permute.xlu0 %1001
        %1003 = vrot.lane.b32.xlu0 %v998, 92
        %v1004 = vpop.permute.xlu0 %1003
        %vm1005 = vcmask 752640
        %v1006 = vsel %vm1005, %v1002, %v1004
        %1008 = vst.msk [vmem:[#allocation2 + $0x18] sm:$0xf] %vm359, %v1006
        %v1009 = vsel %vm973, 1, 0
        %v1010 = vlaneseq
        %v1011 = vshrl.u32 %v1010, 7
        %v1012 = vsub.s32 0, %v1011
        %v1013 = vrot.slane %v1009, %v1012
        %v1014 = vlaneseq
        %v1015 = vshrl.u32 %v1014, 7
        %v1016 = vsub.s32 1, %v1015
        %v1017 = vrot.slane %v1009, %v1016
        %vm1018 = vcmp.eq.s32.totalorder %v1013, 1
        %vm1019 = vcmp.eq.s32.totalorder %v1017, 1
        %v1020 = vsel %vm1018, %v982, 0.0
        %v1021 = vsel %vm1019, %v995, 0.0
        %1024 = vrot.lane.b32.xlu0 %v1020, 92
        %v1025 = vpop.permute.xlu0 %1024
        %1026 = vrot.lane.b32.xlu0 %v1021, 92
        %v1027 = vpop.permute.xlu0 %1026
        %v1028 = vsel %vm1005, %v1025, %v1027
        %1030 = vst.msk [vmem:[#allocation2 + $0x40] sm:$0xf] %vm359, %v1028
        %v1031 = vsel %vm981, 1, 0
        %v1032 = vlaneseq
        %v1033 = vshrl.u32 %v1032, 7
        %v1034 = vsub.s32 0, %v1033
        %v1035 = vrot.slane %v1031, %v1034
        %v1036 = vlaneseq
        %v1037 = vshrl.u32 %v1036, 7
        %v1038 = vsub.s32 1, %v1037
        %v1039 = vrot.slane %v1031, %v1038
        %vm1040 = vcmp.eq.s32.totalorder %v1035, 1
        %vm1041 = vcmp.eq.s32.totalorder %v1039, 1
        %v1042 = vsel %vm1040, %v982, 0.0
        %v1043 = vsel %vm1041, %v995, 0.0
        %1046 = vrot.lane.b32.xlu0 %v1042, 92
        %v1047 = vpop.permute.xlu0 %1046
        %1048 = vrot.lane.b32.xlu0 %v1043, 92
        %v1049 = vpop.permute.xlu0 %1048
        %v1050 = vsel %vm1005, %v1047, %v1049
        %1052 = vst.msk [vmem:[#allocation2 + $0x68] sm:$0xf] %vm359, %v1050
        %v1053 = vld [vmem:[%s356] sm:$0x3]
        %vm1054 = vcmp.ne.f32.partialorder %v1053, 0.0
        %1055 = vrot.lane.b32.xlu0 %v380, 18
        %v1056 = vpop.permute.xlu0 %1055
        %v1057 = vrot.slane %v1056, 7
        %vm1058 = vcmask 146432
        %v1059 = vsel %vm1058, %v1057, %v1056
        %vm1060 = vcmp.ne.s32.totalorder %v1059, 0
        %vm1061 = vmand %vm1054, %vm1060
        %v1062 = vsel %vm1061, %v1053, 0.0
        %v1063 = vmax.f32 %v1062, 0.01
        %v1064 = vmin.f32 %v1063, 256.0
        %v1065 = vrcp.pop %v1064
        %v1066 = vmul.f32 %v368, %v1065
        %1067 = vrot.lane.b32.xlu0 %v376, 18
        %v1068 = vpop.permute.xlu0 %1067
        %v1069 = vrot.slane %v1068, 7
        %v1070 = vsel %vm1058, %v1069, %v1068
        %v1072 = vsub.f32 %v1066, %v1070
        %v1073 = vand.u32 2147483647, %v1072
        %1074 = vrot.lane.b32.xlu0 %v375, 18
        %v1075 = vpop.permute.xlu0 %1074
        %v1076 = vrot.slane %v1075, 7
        %v1077 = vsel %vm1058, %v1076, %v1075
        %vm1079 = vcmp.le.f32.partialorder %v1073, %v1077
        %1080 = vrot.lane.b32.xlu0 %v370, 18
        %v1081 = vpop.permute.xlu0 %1080
        %v1082 = vrot.slane %v1081, 7
        %v1083 = vsel %vm1058, %v1082, %v1081
        %v1085 = vsub.f32 %v1066, %v1083
        %v1086 = vand.u32 2147483647, %v1085
        %vm1087 = vcmp.le.f32.partialorder %v1086, %v1077
        %vm1088 = vmxor %vm1061, 1
        %vm1089 = vmor %vm1087, %vm1088
        %1090 = vrot.lane.b32.xlu0 %v377, 18
        %v1091 = vpop.permute.xlu0 %1090
        %v1092 = vrot.slane %v1091, 7
        %v1093 = vsel %vm1058, %v1092, %v1091
        %v1095 = vsub.f32 %v1066, %v1093
        %v1096 = vand.u32 2147483647, %v1095
        %vm1097 = vcmp.le.f32.partialorder %v1096, %v1077
        %v1098 = vld [vmem:[%s307] sm:$0xff]
        %v1099 = vsel %vm1079, 1, 0
        %v1100 = vlaneseq
        %v1101 = vshrl.u32 %v1100, 7
        %v1102 = vsub.s32 0, %v1101
        %v1103 = vrot.slane %v1099, %v1102
        %v1104 = vlaneseq
        %v1105 = vshrl.u32 %v1104, 7
        %v1106 = vsub.s32 1, %v1105
        %v1107 = vrot.slane %v1099, %v1106
        %vm1108 = vcmp.eq.s32.totalorder %v1103, 1
        %vm1109 = vcmp.eq.s32.totalorder %v1107, 1
        %v1111 = vcombine.high %v1098, %v1098
        %v1113 = vsel %vm1108, %v1098, 0.0
        %v1114 = vsel %vm1109, %v1111, 0.0
        %1117 = vrot.lane.b32.xlu0 %v1113, 91
        %v1118 = vpop.permute.xlu0 %1117
        %1119 = vrot.lane.b32.xlu0 %v1114, 91
        %v1120 = vpop.permute.xlu0 %1119
        %vm1121 = vcmask 744448
        %v1122 = vsel %vm1121, %v1118, %v1120
        %1124 = vst.msk [vmem:[#allocation2 + $0x1c] sm:$0xf] %vm359, %v1122
        %v1125 = vsel %vm1089, 1, 0
        %v1126 = vlaneseq
        %v1127 = vshrl.u32 %v1126, 7
        %v1128 = vsub.s32 0, %v1127
        %v1129 = vrot.slane %v1125, %v1128
        %v1130 = vlaneseq
        %v1131 = vshrl.u32 %v1130, 7
        %v1132 = vsub.s32 1, %v1131
        %v1133 = vrot.slane %v1125, %v1132
        %vm1134 = vcmp.eq.s32.totalorder %v1129, 1
        %vm1135 = vcmp.eq.s32.totalorder %v1133, 1
        %v1136 = vsel %vm1134, %v1098, 0.0
        %v1137 = vsel %vm1135, %v1111, 0.0
        %1140 = vrot.lane.b32.xlu0 %v1136, 91
        %v1141 = vpop.permute.xlu0 %1140
        %1142 = vrot.lane.b32.xlu0 %v1137, 91
        %v1143 = vpop.permute.xlu0 %1142
        %v1144 = vsel %vm1121, %v1141, %v1143
        %1146 = vst.msk [vmem:[#allocation2 + $0x44] sm:$0xf] %vm359, %v1144
        %v1147 = vsel %vm1097, 1, 0
        %v1148 = vlaneseq
        %v1149 = vshrl.u32 %v1148, 7
        %v1150 = vsub.s32 0, %v1149
        %v1151 = vrot.slane %v1147, %v1150
        %v1152 = vlaneseq
        %v1153 = vshrl.u32 %v1152, 7
        %v1154 = vsub.s32 1, %v1153
        %v1155 = vrot.slane %v1147, %v1154
        %vm1156 = vcmp.eq.s32.totalorder %v1151, 1
        %vm1157 = vcmp.eq.s32.totalorder %v1155, 1
        %v1158 = vsel %vm1156, %v1098, 0.0
        %v1159 = vsel %vm1157, %v1111, 0.0
        %1162 = vrot.lane.b32.xlu0 %v1158, 91
        %v1163 = vpop.permute.xlu0 %1162
        %1164 = vrot.lane.b32.xlu0 %v1159, 91
        %v1165 = vpop.permute.xlu0 %1164
        %v1166 = vsel %vm1121, %v1163, %v1165
        %1168 = vst.msk [vmem:[#allocation2 + $0x6c] sm:$0xf] %vm359, %v1166
        %v1169 = vld [vmem:[%s356] sm:$0x3]
        %vm1170 = vcmp.ne.f32.partialorder %v1169, 0.0
        %1171 = vrot.lane.b32.xlu0 %v380, 19
        %v1172 = vpop.permute.xlu0 %1171
        %v1173 = vrot.slane %v1172, 7
        %vm1174 = vcmask 154624
        %v1175 = vsel %vm1174, %v1173, %v1172
        %vm1176 = vcmp.ne.s32.totalorder %v1175, 0
        %vm1177 = vmand %vm1170, %vm1176
        %v1178 = vsel %vm1177, %v1169, 0.0
        %v1179 = vmax.f32 %v1178, 0.01
        %v1180 = vmin.f32 %v1179, 256.0
        %v1181 = vrcp.pop %v1180
        %v1182 = vmul.f32 %v368, %v1181
        %1183 = vrot.lane.b32.xlu0 %v376, 19
        %v1184 = vpop.permute.xlu0 %1183
        %v1185 = vrot.slane %v1184, 7
        %v1186 = vsel %vm1174, %v1185, %v1184
        %v1188 = vsub.f32 %v1182, %v1186
        %v1189 = vand.u32 2147483647, %v1188
        %1190 = vrot.lane.b32.xlu0 %v375, 19
        %v1191 = vpop.permute.xlu0 %1190
        %v1192 = vrot.slane %v1191, 7
        %v1193 = vsel %vm1174, %v1192, %v1191
        %vm1195 = vcmp.le.f32.partialorder %v1189, %v1193
        %1196 = vrot.lane.b32.xlu0 %v370, 19
        %v1197 = vpop.permute.xlu0 %1196
        %v1198 = vrot.slane %v1197, 7
        %v1199 = vsel %vm1174, %v1198, %v1197
        %v1201 = vsub.f32 %v1182, %v1199
        %v1202 = vand.u32 2147483647, %v1201
        %vm1203 = vcmp.le.f32.partialorder %v1202, %v1193
        %vm1204 = vmxor %vm1177, 1
        %vm1205 = vmor %vm1203, %vm1204
        %1206 = vrot.lane.b32.xlu0 %v377, 19
        %v1207 = vpop.permute.xlu0 %1206
        %v1208 = vrot.slane %v1207, 7
        %v1209 = vsel %vm1174, %v1208, %v1207
        %v1211 = vsub.f32 %v1182, %v1209
        %v1212 = vand.u32 2147483647, %v1211
        %vm1213 = vcmp.le.f32.partialorder %v1212, %v1193
        %v1214 = vld [vmem:[%s307] sm:$0xff]
        %v1215 = vsel %vm1195, 1, 0
        %v1216 = vlaneseq
        %v1217 = vshrl.u32 %v1216, 7
        %v1218 = vsub.s32 0, %v1217
        %v1219 = vrot.slane %v1215, %v1218
        %v1220 = vlaneseq
        %v1221 = vshrl.u32 %v1220, 7
        %v1222 = vsub.s32 1, %v1221
        %v1223 = vrot.slane %v1215, %v1222
        %vm1224 = vcmp.eq.s32.totalorder %v1219, 1
        %vm1225 = vcmp.eq.s32.totalorder %v1223, 1
        %v1227 = vcombine.high %v1214, %v1214
        %v1229 = vsel %vm1224, %v1214, 0.0
        %v1230 = vsel %vm1225, %v1227, 0.0
        %1233 = vrot.lane.b32.xlu0 %v1229, 90
        %v1234 = vpop.permute.xlu0 %1233
        %1235 = vrot.lane.b32.xlu0 %v1230, 90
        %v1236 = vpop.permute.xlu0 %1235
        %vm1237 = vcmask 736256
        %v1238 = vsel %vm1237, %v1234, %v1236
        %1240 = vst.msk [vmem:[#allocation2 + $0x20] sm:$0xf] %vm359, %v1238
        %v1241 = vsel %vm1205, 1, 0
        %v1242 = vlaneseq
        %v1243 = vshrl.u32 %v1242, 7
        %v1244 = vsub.s32 0, %v1243
        %v1245 = vrot.slane %v1241, %v1244
        %v1246 = vlaneseq
        %v1247 = vshrl.u32 %v1246, 7
        %v1248 = vsub.s32 1, %v1247
        %v1249 = vrot.slane %v1241, %v1248
        %vm1250 = vcmp.eq.s32.totalorder %v1245, 1
        %vm1251 = vcmp.eq.s32.totalorder %v1249, 1
        %v1252 = vsel %vm1250, %v1214, 0.0
        %v1253 = vsel %vm1251, %v1227, 0.0
        %1256 = vrot.lane.b32.xlu0 %v1252, 90
        %v1257 = vpop.permute.xlu0 %1256
        %1258 = vrot.lane.b32.xlu0 %v1253, 90
        %v1259 = vpop.permute.xlu0 %1258
        %v1260 = vsel %vm1237, %v1257, %v1259
        %1262 = vst.msk [vmem:[#allocation2 + $0x48] sm:$0xf] %vm359, %v1260
        %v1263 = vsel %vm1213, 1, 0
        %v1264 = vlaneseq
        %v1265 = vshrl.u32 %v1264, 7
        %v1266 = vsub.s32 0, %v1265
        %v1267 = vrot.slane %v1263, %v1266
        %v1268 = vlaneseq
        %v1269 = vshrl.u32 %v1268, 7
        %v1270 = vsub.s32 1, %v1269
        %v1271 = vrot.slane %v1263, %v1270
        %vm1272 = vcmp.eq.s32.totalorder %v1267, 1
        %vm1273 = vcmp.eq.s32.totalorder %v1271, 1
        %v1274 = vsel %vm1272, %v1214, 0.0
        %v1275 = vsel %vm1273, %v1227, 0.0
        %1278 = vrot.lane.b32.xlu0 %v1274, 90
        %v1279 = vpop.permute.xlu0 %1278
        %1280 = vrot.lane.b32.xlu0 %v1275, 90
        %v1281 = vpop.permute.xlu0 %1280
        %v1282 = vsel %vm1237, %v1279, %v1281
        %1284 = vst.msk [vmem:[#allocation2 + $0x70] sm:$0xf] %vm359, %v1282
        %v1285 = vld [vmem:[#allocation10] sm:$0xff]
        %v1286 = vld [vmem:[#allocation2] sm:$0xff]
        %v1287 = vld [vmem:[#allocation2 + $0x8] sm:$0xff]
        %v1288 = vld [vmem:[#allocation2 + $0x10] sm:$0xff]
        %v1289 = vld [vmem:[#allocation2 + $0x18] sm:$0xff]
        %v1290 = vld [vmem:[#allocation2 + $0x20] sm:$0xff]
        %v1291 = vld [vmem:[#allocation2 + $0x28] sm:$0xff]
        %v1292 = vld [vmem:[#allocation2 + $0x30] sm:$0xff]
        %v1293 = vld [vmem:[#allocation2 + $0x38] sm:$0xff]
        %v1294 = vld [vmem:[#allocation2 + $0x40] sm:$0xff]
        %v1295 = vld [vmem:[#allocation2 + $0x48] sm:$0xff]
        %v1296 = vld [vmem:[#allocation2 + $0x50] sm:$0xff]
        %v1297 = vld [vmem:[#allocation2 + $0x58] sm:$0xff]
        %v1298 = vld [vmem:[#allocation2 + $0x60] sm:$0xff]
        %v1299 = vld [vmem:[#allocation2 + $0x68] sm:$0xff]
        %v1300 = vld [vmem:[#allocation2 + $0x70] sm:$0xff]
        %v1301 = vld [vmem:[%s5] sm:$0xff]
        %1303 = vset.pattern.permute.xlu0 0
        %1304 = vperm.xlu0 %1303, %v1301
        %v1305 = vpop.permute.xlu0 %1304
        %vm1307 = vcmask 982016
        %v1309 = vsel %vm1307, %v1285, 0
        %1311 = vmatprep.subr.mxu0 0.0
        %1312 = vmatpush1.msra.mxu0 0.0
        %1313 = vmatprep.subr.mxu0 0.0
        %1314 = vmatpush1.msra.mxu0 %v1300
        %1315 = vmatprep.subr.mxu0 0.0
        %1316 = vmatpush1.msra.mxu0 %v1299
        %1317 = vmatprep.subr.mxu0 0.0
        %1318 = vmatpush1.msra.mxu0 %v1298
        %1319 = vmatprep.subr.mxu0 0.0
        %1320 = vmatpush1.msra.mxu0 %v1297
        %1321 = vmatprep.subr.mxu0 0.0
        %1322 = vmatpush1.msra.mxu0 %v1296
        %1323 = vmatprep.subr.mxu0 0.0
        %1324 = vmatpush1.msra.mxu0 %v1295
        %1325 = vmatprep.subr.mxu0 0.0
        %1326 = vmatpush1.msra.mxu0 %v1294
        %1327 = vmatprep.subr.mxu0 0.0
        %1328 = vmatpush1.msra.mxu0 %v1293
        %1329 = vmatprep.subr.mxu0 0.0
        %1330 = vmatpush1.msra.mxu0 %v1292
        %1331 = vmatprep.subr.mxu0 0.0
        %1332 = vmatpush1.msra.mxu0 %v1291
        %1333 = vmatprep.subr.mxu0 0.0
        %1334 = vmatpush1.msra.mxu0 %v1290
        %1335 = vmatprep.subr.mxu0 0.0
        %1336 = vmatpush1.msra.mxu0 %v1289
        %1337 = vmatprep.subr.mxu0 0.0
        %1338 = vmatpush1.msra.mxu0 %v1288
        %1339 = vmatprep.subr.mxu0 0.0
        %1340 = vmatpush1.msra.mxu0 %v1287
        %1341 = vmatprep.subr.mxu0 0.0
        %1342 = vmatpush1.msra.mxu0 %v1286
        %1343 = vmatprep.subr.mxu0 0.0
        %1344 = vmatpush2.msra.mxu0 0.0
        %1345 = vmatprep.subr.mxu0 0.0
        %1346 = vmatpush2.msra.mxu0 0.0
        %1347 = vmatprep.subr.mxu0 0.0
        %1348 = vmatpush2.msra.mxu0 0.0
        %1349 = vmatprep.subr.mxu0 0.0
        %1350 = vmatpush2.msra.mxu0 0.0
        %1351 = vmatprep.subr.mxu0 0.0
        %1352 = vmatpush2.msra.mxu0 0.0
        %1353 = vmatprep.subr.mxu0 0.0
        %1354 = vmatpush2.msra.mxu0 0.0
        %1355 = vmatprep.subr.mxu0 0.0
        %1356 = vmatpush2.msra.mxu0 0.0
        %1357 = vmatprep.subr.mxu0 0.0
        %1358 = vmatpush2.msra.mxu0 0.0
        %1359 = vmatprep.subr.mxu0 0.0
        %1360 = vmatpush2.msra.mxu0 0.0
        %1361 = vmatprep.subr.mxu0 0.0
        %1362 = vmatpush2.msra.mxu0 0.0
        %1363 = vmatprep.subr.mxu0 0.0
        %1364 = vmatpush2.msra.mxu0 0.0
        %1365 = vmatprep.subr.mxu0 0.0
        %1366 = vmatpush2.msra.mxu0 0.0
        %1367 = vmatprep.subr.mxu0 0.0
        %1368 = vmatpush2.msra.mxu0 0.0
        %1369 = vmatprep.subr.mxu0 0.0
        %1370 = vmatpush2.msra.mxu0 0.0
        %1371 = vmatprep.subr.mxu0 0.0
        %1372 = vmatpush2.msra.mxu0 0.0
        %1373 = vmatprep.subr.mxu0 0.0
        %1374 = vmatpush2.msra.mxu0 0.0
        %1375 = vmatprep.mubr.f32.mxu0 0.0
        %1376 = vmatmul.mubr.f32.gmra.mxu0 %v1309
        %v1377 = vpop.f32.mrf.mxu0
        %v1378 = vadd.f32 %v1305, %v1377
        %v1379 = vpop.f32.mrf.mxu0
        %1380 = vdwg.mxu0
        %vm1381 = vcmask 1031168
        %1382 = vst.msk [vmem:[%s348] sm:$0xff] %vm1381, %v1378
        %s1383 = sand.u32 %s188, 1
        %s1384 = scalar_lea.sflag [#allocation5], %s1383
        %s1385 = sand.u32 %s188, 1
        %s1386 = smul.addr %s1385, 8
        %s1387 = scalar_lea.vmem [#allocation12], %s1386
        // Predicated region
        $region61: #{tpu_custom_call.1} parent=43 // pred_check
          %p1388 = pneg %p198
        $region62: #{tpu_custom_call.1} parent=43 // pred_check_branch
          %1390 = sbr.rel (%p1388) target = $region64
        $region63: #{tpu_custom_call.1} parent=43 // pred_region
          %s1392 = ssub.s32 128, 128
          %1393 = vsyncadd %s1384, %s1392
          %s1394 = smul.addr %s30, 3
          %s1395 = sadd.s32 %s31, %s1394
          %s1396 = smul.addr %s1395, 128
          %s1397 = scalar_lea.hbm %s6, %s1396
          %s1399 = sshll.u32 %s1387, 4
          %s1400 = int_to_ptr.vmem [resolvable:$true] %s1399
          %1402 = dma.vmem_to_hbm [thread:$0]  %s1400, 128, %s1397, %s1384
        $region64: #{tpu_custom_call.1} parent=43 // pred_fallthru
          _
      $region44: #{tpu_custom_call.1} parent=5 // pred_fallthru
        _
      %p1403 = scmp.le.s32.totalorder 2, %s21
      // Predicated region
      $region65: #{tpu_custom_call.1} parent=5 // pred_check
        %p1404 = pneg %p1403
      $region66: #{tpu_custom_call.1} parent=5 // pred_check_branch
        %1406 = sbr.rel (%p1404) target = $region68
      $region67: #{tpu_custom_call.1} parent=5 // pred_region
        %s1407 = ssub.s32 %s21, 2
        // Predicated region
        $region69: #{tpu_custom_call.1} parent=67 // pred_check
          %p1408 = pneg %p204
        $region70: #{tpu_custom_call.1} parent=67 // pred_check_branch
          %1410 = sbr.rel (%p1408) target = $region72
        $region71: #{tpu_custom_call.1} parent=67 // pred_region
          %s1411 = sand.u32 %s189, 1
          %s1412 = scalar_lea.sflag [#allocation5], %s1411
          %s1413 = sand.u32 %s189, 1
          %s1414 = smul.addr %s1413, 8
          %s1415 = scalar_lea.vmem [#allocation12], %s1414
          %1416 = dma.done %s1412, 128
        $region72: #{tpu_custom_call.1} parent=67 // pred_fallthru
          _
      $region68: #{tpu_custom_call.1} parent=5 // pred_fallthru
        _
    $region6: #{tpu_custom_call.1} parent=1 // loop_footer
      %s25 = sadd.s32 1, %s21
    $region7: #{tpu_custom_call.1} parent=1 // loop_footer_branch
      %20 = sbr.rel target = $region3
    $region8: #{tpu_custom_call.1} parent=1 // loop_exit
      _
    %1417 = vsyncpa [#allocation4], 1
    %s1418 = scalar_lea.sflag [#allocation4], 1
    %1419 = vsyncpa %s1418, 1
    %1420 = vsyncpa [#allocation11], 1
    %1421 = vsyncpa [#allocation5], 1
    %s1422 = scalar_lea.sflag [#allocation5], 1
    %1423 = vsyncpa %s1422, 1
    %1424 = vsyncpa [#allocation6], 1
    %s1425 = scalar_lea.sflag [#allocation6], 1
    %1426 = vsyncpa %s1425, 1
    %1427 = vsyncpa [#allocation8], 1

</llo_original>
